<compile_context>
chip_gen: v7x
topology: tpu7x:2x2x1
jax: 0.10.0
libtpu: 0.0.40
codegen_flags: <defaults>
</compile_context>

<pallas_src>
import functools

import jax
import jax.numpy as jnp
from jax.experimental import pallas as pl
from jax.experimental.pallas import tpu as pltpu

LANE = 128
SUBLANE = 8
H1 = 1024
H2 = 512


def _round_up(x, m):
    return (x + m - 1) // m * m


# ----------------------------- Pallas kernel ---------------------------------
def adversarial_net_kernel(
    feat_ref,        # (TB, Dp)      f32   features tile (cast to bf16 in-kernel)
    wcat_ref,        # (Dp, Lp+H1)   bf16  [classifier W | domain W1] fused
    bcat_ref,        # (1, Lp+H1)    f32   [classifier b | domain b1]
    w2_ref,          # (H1, H2)      bf16  domain linear 2
    b2_ref,          # (1, H2)       f32
    w3row_ref,       # (1, H2)       f32   domain head (512 -> 1) as a row
    b3_ref,          # (1, 1)        f32
    class_out_ref,   # (TB, Lp)      f32   lane-dense output slab
    domain_out_ref,  # (TB, 128)     f32   lane-dense output slab (col 0 real)
):
    lp = class_out_ref.shape[1]

    # In-kernel bf16 cast (VPU work hidden under the MXU) instead of a
    # wrapper-side HBM pad/cast round trip.
    f = feat_ref[...].astype(jnp.bfloat16)

    # One MXU pass for classifier + first domain layer (shared LHS; the
    # classifier's small N rides along at full MXU width).  f32 accumulate.
    z = jnp.dot(f, wcat_ref[...], preferred_element_type=jnp.float32) + bcat_ref[...]
    class_out_ref[...] = z[:, :lp]

    # GRL is identity in forward; Dropout(p=0.3) identity in eval mode.
    h1 = jnp.maximum(z[:, lp:], 0.0)
    h2 = jnp.maximum(
        jnp.dot(h1.astype(jnp.bfloat16), w2_ref[...],
                preferred_element_type=jnp.float32) + b2_ref[...],
        0.0,
    )

    # (512 -> 1) head off the MXU: VPU multiply + XLU lane reduction (slots with
    # slack under the MXU), then lane-broadcast so the store stays unmasked.
    logit = jnp.sum(h2 * w3row_ref[...], axis=-1, keepdims=True) + b3_ref[...]
    domain_out_ref[...] = jnp.broadcast_to(
        jax.nn.sigmoid(logit), domain_out_ref.shape)


# ------------------------- one-time weight preparation ------------------------
def prepare_head_params(params):
    """Pad / cast / fuse the head weights ONCE, outside the per-call jit path."""
    wc, bc = params["wc"], params["bc"]
    w1, b1 = params["w1"], params["b1"]
    w2, b2 = params["w2"], params["b2"]
    w3, b3 = params["w3"], params["b3"]
    D, L = wc.shape
    Dp, Lp = _round_up(D, LANE), _round_up(L, LANE)

    def pad2(a, rows, cols, dtype):
        out = jnp.zeros((rows, cols), dtype)
        return out.at[: a.shape[0], : a.shape[1]].set(a.astype(dtype))

    wcat = jnp.concatenate(
        [pad2(wc, Dp, Lp, jnp.bfloat16), pad2(w1, Dp, H1, jnp.bfloat16)], axis=1)
    bcat = jnp.concatenate(
        [pad2(bc, 1, Lp, jnp.float32), b1.astype(jnp.float32).reshape(1, H1)],
        axis=1)
    return dict(
        wcat=wcat,                                      # (Dp, Lp+H1) bf16
        bcat=bcat,                                      # (1, Lp+H1)  f32
        w2=w2.astype(jnp.bfloat16),                     # (H1, H2)    bf16
        b2=b2.astype(jnp.float32).reshape(1, H2),       # (1, H2)     f32
        w3row=w3.astype(jnp.float32).reshape(1, H2),    # (1, H2)     f32
        b3=b3.astype(jnp.float32).reshape(1, 1),        # (1, 1)      f32
    )


# ------------------------------- wrapper --------------------------------------
def adversarial_net_heads(features, hp, *, num_labels, tb=512):
    """Fused classifier + domain-classifier heads in one gridded Pallas kernel."""
    B, D = features.shape
    Dp = hp["wcat"].shape[0]
    Lp = hp["wcat"].shape[1] - H1

    # Batch tiling: large tiles (fewer ~0.35us pipeline steps), but always
    # >= 2 grid steps once Bp >= 16 so v7x's second TensorCore gets work, and
    # minimal batch padding (TB = ceil(Bp/steps) rounded up to the sublane).
    Bp0 = _round_up(B, SUBLANE)
    if Bp0 < 2 * SUBLANE:
        TB = Bp0
    else:
        steps = max(2, pl.cdiv(Bp0, tb))
        TB = _round_up(pl.cdiv(Bp0, steps), SUBLANE)
    Bp = _round_up(B, TB)

    # Features stay f32 (bf16 cast happens in-kernel).  Pad only when B/D are
    # not already tile-aligned (typical transformer widths D % 128 == 0 skip
    # the D padding entirely).
    if B == Bp and D == Dp:
        f = features
    else:
        f = jnp.zeros((Bp, Dp), features.dtype).at[:B, :D].set(features)

    grid = (Bp // TB,)
    feat_map = lambda i: (i, 0)     # tiled along batch
    const_map = lambda i: (0, 0)    # weights resident across the whole grid

    in_specs = [
        pl.BlockSpec((TB, Dp), feat_map),
        pl.BlockSpec((Dp, Lp + H1), const_map),
        pl.BlockSpec((1, Lp + H1), const_map),
        pl.BlockSpec((H1, H2), const_map),
        pl.BlockSpec((1, H2), const_map),
        pl.BlockSpec((1, H2), const_map),
        pl.BlockSpec((1, 1), const_map),
    ]
    out_specs = (
        pl.BlockSpec((TB, Lp), feat_map),
        pl.BlockSpec((TB, LANE), feat_map),
    )

    bytes_in = (
        f.size * f.dtype.itemsize
        + (hp["wcat"].size + hp["w2"].size) * 2
        + (hp["bcat"].size + hp["b2"].size + hp["w3row"].size + hp["b3"].size) * 4
    )
    bytes_out = (Bp * Lp + Bp * LANE) * 4
    cost = pl.CostEstimate(
        flops=2 * Bp * (Dp * (Lp + H1) + H1 * H2 + H2),
        transcendentals=Bp,
        bytes_accessed=bytes_in + bytes_out,
    )

    class_pad, domain_pad = pl.pallas_call(
        adversarial_net_kernel,
        out_shape=(
            jax.ShapeDtypeStruct((Bp, Lp), jnp.float32),
            jax.ShapeDtypeStruct((Bp, LANE), jnp.float32),
        ),
        grid=grid,
        in_specs=in_specs,
        out_specs=out_specs,
        compiler_params=pltpu.CompilerParams(
            dimension_semantics=("parallel",),      # shards batch tiles on v7x 2-TC
            vmem_limit_bytes=32 * 1024 * 1024,      # safe on v5e/v6e/v7x
        ),
        cost_estimate=cost,
    )(f, hp["wcat"], hp["bcat"], hp["w2"], hp["b2"], hp["w3row"], hp["b3"])

    return class_pad[:B, :num_labels], domain_pad[:B, :1]


# ------------------------------ glue / setup ----------------------------------
def init_params(key, inp_size, num_labels):
    """Deterministic init; weights stored as (in, out) == PyTorch weight.T."""
    ks = jax.random.split(key, 8)

    def lin(kw, kb, fan_in, fan_out):
        bound = 1.0 / jnp.sqrt(fan_in)
        w = jax.random.uniform(kw, (fan_in, fan_out), jnp.float32, -bound, bound)
        b = jax.random.uniform(kb, (1, fan_out), jnp.float32, -bound, bound)
        return w, b

    wc, bc = lin(ks[0], ks[1], inp_size, num_labels)
    w1, b1 = lin(ks[2], ks[3], inp_size, 1024)
    w2, b2 = lin(ks[4], ks[5], 1024, 512)
    w3, b3 = lin(ks[6], ks[7], 512, 1)
    return dict(wc=wc, bc=bc, w1=w1, b1=b1, w2=w2, b2=b2, w3=w3, b3=b3)


def synthetic_feature_extractor_cls(x, w_patch, b_patch):
    """Stand-in for `feature_extractor(pixel_values=x).last_hidden_state[:, 0, :]`.

    Only the CLS-position (token 0 == top-left 8x8 patch) embedding is computed;
    the rest of the sequence would be sliced away anyway.  The external
    feature_extractor is not part of AdversarialNet itself (glue only).
    """
    B, C, H, W = x.shape
    P = 8
    patch0 = x[:, :, :P, :P].reshape(B, C * P * P)     # same (C, P, P) ordering
    return patch0 @ w_patch + b_patch                  # (B, inp_size)


def adversarial_net_forward(x, patch_params, head_params, *, num_labels):
    w_patch, b_patch = patch_params
    features = synthetic_feature_extractor_cls(x, w_patch, b_patch)
    return adversarial_net_heads(features, head_params, num_labels=num_labels)


# ---------------------------------- main --------------------------------------
if __name__ == "__main__":
    key = jax.random.PRNGKey(0)
    k_x, k_params, k_pw, k_pb = jax.random.split(key, 4)

    # Small shapes consistent with the module.
    B, C, H, W = 2, 3, 16, 16       # pixel_values, NCHW (PyTorch conv layout)
    inp_size = 32                   # hidden size of the feature extractor
    num_labels = 4

    x = jax.random.normal(k_x, (B, C, H, W), jnp.float32)

    # Stand-in feature-extractor params (patch embedding).
    patch_dim = C * 8 * 8
    w_patch = jax.random.normal(k_pw, (patch_dim, inp_size), jnp.float32) * 0.02
    b_patch = jax.random.normal(k_pb, (inp_size,), jnp.float32) * 0.02

    params = init_params(k_params, inp_size, num_labels)
    head_params = prepare_head_params(params)   # pad / cast / fuse weights ONCE

    fwd = jax.jit(functools.partial(adversarial_net_forward,
                                    num_labels=num_labels))
    class_out, domain_out = fwd(x, (w_patch, b_patch), head_params)
    jax.block_until_ready((class_out, domain_out))

    # Pure-JAX f32 reference of the fused head (bf16 MXU operands -> looser tol).
    feats = synthetic_feature_extractor_cls(x, w_patch, b_patch)
    ref_class = feats @ params["wc"] + params["bc"]
    h1 = jnp.maximum(feats @ params["w1"] + params["b1"], 0.0)
    h2 = jnp.maximum(h1 @ params["w2"] + params["b2"], 0.0)
    ref_domain = jax.nn.sigmoid(h2 @ params["w3"] + params["b3"])

    assert class_out.shape == (B, num_labels)
    assert domain_out.shape == (B, 1)
    assert jnp.allclose(class_out, ref_class, atol=2e-2, rtol=2e-2)
    assert jnp.allclose(domain_out, ref_domain, atol=2e-2, rtol=2e-2)

    print("KERNEL_OK")
</pallas_src>

<mosaic_0001>
module attributes {stable_mosaic.version = 11 : i64} {
  func.func @adversarial_net_kernel(%arg0: i32, %arg1: memref<8x128xf32, #tpu.memory_space<vmem>>, %arg2: memref<128x1152xbf16, #tpu.memory_space<vmem>>, %arg3: memref<1x1152xf32, #tpu.memory_space<vmem>>, %arg4: memref<1024x512xbf16, #tpu.memory_space<vmem>>, %arg5: memref<1x512xf32, #tpu.memory_space<vmem>>, %arg6: memref<1x512xf32, #tpu.memory_space<vmem>>, %arg7: memref<1x1xf32, #tpu.memory_space<vmem>>, %arg8: memref<8x128xf32, #tpu.memory_space<vmem>>, %arg9: memref<8x128xf32, #tpu.memory_space<vmem>>) attributes {dimension_semantics = [#tpu.dimension_semantics<parallel>], iteration_bounds = array<i64: 1>, scalar_prefetch = 0 : i64, scratch_operands = 0 : i64, tpu.core_type = #tpu.core_type<tc>, window_params = [{transform_indices = @transform_0, window_bounds = array<i64: 8, 128>}, {pipeline_mode = #tpu.pipeline_mode<synchronous>, transform_indices = @transform_1, window_bounds = array<i64: 128, 1152>}, {pipeline_mode = #tpu.pipeline_mode<synchronous>, transform_indices = @transform_2, window_bounds = array<i64: 1, 1152>}, {pipeline_mode = #tpu.pipeline_mode<synchronous>, transform_indices = @transform_3, window_bounds = array<i64: 1024, 512>}, {pipeline_mode = #tpu.pipeline_mode<synchronous>, transform_indices = @transform_4, window_bounds = array<i64: 1, 512>}, {pipeline_mode = #tpu.pipeline_mode<synchronous>, transform_indices = @transform_5, window_bounds = array<i64: 1, 512>}, {pipeline_mode = #tpu.pipeline_mode<synchronous>, transform_indices = @transform_6, window_bounds = array<i64: 1, 1>}, {transform_indices = @transform_7, window_bounds = array<i64: 8, 128>}, {transform_indices = @transform_8, window_bounds = array<i64: 8, 128>}]} {
    %c0 = arith.constant 0 : index
    %c0_0 = arith.constant 0 : index
    %0 = vector.load %arg1[%c0, %c0_0] : memref<8x128xf32, #tpu.memory_space<vmem>>, vector<8x128xf32>
    %1 = arith.truncf %0 : vector<8x128xf32> to vector<8x128xbf16>
    %c0_1 = arith.constant 0 : index
    %c0_2 = arith.constant 0 : index
    %2 = vector.load %arg2[%c0_1, %c0_2] : memref<128x1152xbf16, #tpu.memory_space<vmem>>, vector<128x1152xbf16>
    %cst = arith.constant dense<0.000000e+00> : vector<8x1152xf32>
    %3 = tpu.matmul %1, %2, %cst {dimension_numbers = #tpu.dot_dimension_numbers<[1], [0], [0], [1], [0, 0, 1, 1], [], []>} : vector<8x128xbf16>, vector<128x1152xbf16>, vector<8x1152xf32> -> vector<8x1152xf32>
    %c0_3 = arith.constant 0 : index
    %c0_4 = arith.constant 0 : index
    %4 = vector.load %arg3[%c0_3, %c0_4] : memref<1x1152xf32, #tpu.memory_space<vmem>>, vector<1x1152xf32>
    %5 = vector.broadcast %4 : vector<1x1152xf32> to vector<8x1152xf32>
    %6 = arith.addf %3, %5 : vector<8x1152xf32>
    %7 = vector.extract_strided_slice %6 {offsets = [0, 0], sizes = [8, 128], strides = [1, 1]} : vector<8x1152xf32> to vector<8x128xf32>
    %c0_5 = arith.constant 0 : index
    %c0_6 = arith.constant 0 : index
    %8 = vector.load %arg8[%c0_5, %c0_6] : memref<8x128xf32, #tpu.memory_space<vmem>>, vector<8x128xf32>
    tpu.vector_store %arg8[%c0_5, %c0_6], %7 {strides = array<i32>} : memref<8x128xf32, #tpu.memory_space<vmem>>, vector<8x128xf32>,
    %9 = vector.extract_strided_slice %6 {offsets = [0, 128], sizes = [8, 1024], strides = [1, 1]} : vector<8x1152xf32> to vector<8x1024xf32>
    %cst_7 = arith.constant 0.000000e+00 : f32
    %10 = vector.broadcast %cst_7 : f32 to vector<8x1024xf32>
    %11 = arith.maximumf %9, %10 : vector<8x1024xf32>
    %12 = arith.truncf %11 : vector<8x1024xf32> to vector<8x1024xbf16>
    %c0_8 = arith.constant 0 : index
    %c0_9 = arith.constant 0 : index
    %13 = vector.load %arg4[%c0_8, %c0_9] : memref<1024x512xbf16, #tpu.memory_space<vmem>>, vector<1024x512xbf16>
    %cst_10 = arith.constant dense<0.000000e+00> : vector<8x512xf32>
    %14 = tpu.matmul %12, %13, %cst_10 {dimension_numbers = #tpu.dot_dimension_numbers<[1], [0], [0], [1], [0, 0, 1, 1], [], []>} : vector<8x1024xbf16>, vector<1024x512xbf16>, vector<8x512xf32> -> vector<8x512xf32>
    %c0_11 = arith.constant 0 : index
    %c0_12 = arith.constant 0 : index
    %15 = vector.load %arg5[%c0_11, %c0_12] : memref<1x512xf32, #tpu.memory_space<vmem>>, vector<1x512xf32>
    %16 = vector.broadcast %15 : vector<1x512xf32> to vector<8x512xf32>
    %17 = arith.addf %14, %16 : vector<8x512xf32>
    %cst_13 = arith.constant 0.000000e+00 : f32
    %18 = vector.broadcast %cst_13 : f32 to vector<8x512xf32>
    %19 = arith.maximumf %17, %18 : vector<8x512xf32>
    %c0_14 = arith.constant 0 : index
    %c0_15 = arith.constant 0 : index
    %20 = vector.load %arg6[%c0_14, %c0_15] : memref<1x512xf32, #tpu.memory_space<vmem>>, vector<1x512xf32>
    %21 = vector.broadcast %20 : vector<1x512xf32> to vector<8x512xf32>
    %22 = arith.mulf %19, %21 : vector<8x512xf32>
    %cst_16 = arith.constant dense<0.000000e+00> : vector<8xf32>
    %23 = vector.multi_reduction <add>, %22, %cst_16 [1] : vector<8x512xf32> to vector<8xf32>
    %24 = vector.shape_cast %23 : vector<8xf32> to vector<8x1xf32>
    %c0_17 = arith.constant 0 : index
    %c0_18 = arith.constant 0 : index
    %25 = vector.load %arg7[%c0_17, %c0_18] : memref<1x1xf32, #tpu.memory_space<vmem>>, vector<1x1xf32>
    %26 = vector.broadcast %25 : vector<1x1xf32> to vector<8x1xf32>
    %27 = arith.addf %24, %26 : vector<8x1xf32>
    %28 = arith.negf %27 : vector<8x1xf32>
    %29 = math.exp %28 : vector<8x1xf32>
    %cst_19 = arith.constant 1.000000e+00 : f32
    %30 = vector.broadcast %cst_19 : f32 to vector<8x1xf32>
    %31 = arith.addf %30, %29 : vector<8x1xf32>
    %32 = arith.divf %30, %31 : vector<8x1xf32>
    %33 = vector.shape_cast %32 : vector<8x1xf32> to vector<8x1xf32>
    %34 = vector.broadcast %33 : vector<8x1xf32> to vector<8x128xf32>
    %c0_20 = arith.constant 0 : index
    %c0_21 = arith.constant 0 : index
    %35 = vector.load %arg9[%c0_20, %c0_21] : memref<8x128xf32, #tpu.memory_space<vmem>>, vector<8x128xf32>
    tpu.vector_store %arg9[%c0_20, %c0_21], %34 {strides = array<i32>} : memref<8x128xf32, #tpu.memory_space<vmem>>, vector<8x128xf32>,
    return
  }
  func.func @transform_0(%arg0: i32) -> (i32, i32) {
    %c0_i32 = arith.constant 0 : i32
    %c0_i32_0 = arith.constant 0 : i32
    return %arg0, %c0_i32 : i32, i32
  }
  func.func @transform_1(%arg0: i32) -> (i32, i32) {
    %c0_i32 = arith.constant 0 : i32
    %c0_i32_0 = arith.constant 0 : i32
    %c0_i32_1 = arith.constant 0 : i32
    return %c0_i32, %c0_i32_0 : i32, i32
  }
  func.func @transform_2(%arg0: i32) -> (i32, i32) {
    %c0_i32 = arith.constant 0 : i32
    %c0_i32_0 = arith.constant 0 : i32
    %c0_i32_1 = arith.constant 0 : i32
    return %c0_i32, %c0_i32_0 : i32, i32
  }
  func.func @transform_3(%arg0: i32) -> (i32, i32) {
    %c0_i32 = arith.constant 0 : i32
    %c0_i32_0 = arith.constant 0 : i32
    %c0_i32_1 = arith.constant 0 : i32
    return %c0_i32, %c0_i32_0 : i32, i32
  }
  func.func @transform_4(%arg0: i32) -> (i32, i32) {
    %c0_i32 = arith.constant 0 : i32
    %c0_i32_0 = arith.constant 0 : i32
    %c0_i32_1 = arith.constant 0 : i32
    return %c0_i32, %c0_i32_0 : i32, i32
  }
  func.func @transform_5(%arg0: i32) -> (i32, i32) {
    %c0_i32 = arith.constant 0 : i32
    %c0_i32_0 = arith.constant 0 : i32
    %c0_i32_1 = arith.constant 0 : i32
    return %c0_i32, %c0_i32_0 : i32, i32
  }
  func.func @transform_6(%arg0: i32) -> (i32, i32) {
    %c0_i32 = arith.constant 0 : i32
    %c0_i32_0 = arith.constant 0 : i32
    %c0_i32_1 = arith.constant 0 : i32
    return %c0_i32, %c0_i32_0 : i32, i32
  }
  func.func @transform_7(%arg0: i32) -> (i32, i32) {
    %c0_i32 = arith.constant 0 : i32
    %c0_i32_0 = arith.constant 0 : i32
    return %arg0, %c0_i32 : i32, i32
  }
  func.func @transform_8(%arg0: i32) -> (i32, i32) {
    %c0_i32 = arith.constant 0 : i32
    %c0_i32_0 = arith.constant 0 : i32
    return %arg0, %c0_i32 : i32, i32
  }
}

</mosaic_0001>

<llo_original>
// kernel: adversarial_net_forward.1
$region0: #{adversarial_net_forward.1}
  #allocation0 [shape = 'u32[]', space=smem, size = 0x4, offset = 0x4, fixed_abs, tag = 'smem constant byte address 0x4 - core index']
  #allocation1 [shape = 'u32[144,128]{1,0:T(1,128)}', space=vmem, size = 0x12000, scoped, tag = 'internal scratch']
  #allocation2 [shape = 'f32[1,1]{1,0:T(1,128)S(1)}', space=vmem, size = 0x200, scoped, tag = 'scoped memory for adversarial_net_forward.1']
  %s0 = inlined_call_operand.vmem [shape: f32[8,128], index: 0, kind: input, shape index: {}]
  %s1 = inlined_call_operand.hbm [shape: bf16[128,1152], index: 1, kind: input, shape index: {}]
  %s2 = inlined_call_operand.vmem [shape: f32[1,1152], index: 2, kind: input, shape index: {}]
  %s3 = inlined_call_operand.hbm [shape: bf16[1024,512], index: 3, kind: input, shape index: {}]
  %s4 = inlined_call_operand.vmem [shape: f32[1,512], index: 4, kind: input, shape index: {}]
  %s5 = inlined_call_operand.vmem [shape: f32[1,512], index: 5, kind: input, shape index: {}]
  %s6 = inlined_call_operand.<no memory space> [shape: f32[1,1], index: 6, kind: input, shape index: {}]
  %s7 = inlined_call_operand.vmem [shape: f32[8,128], index: 7, kind: output, shape index: {0}]
  %s8 = inlined_call_operand.vmem [shape: f32[8,128], index: 8, kind: output, shape index: {1}]
  %9 = xla_tuple %s7, %s8
  %s10 = sld [smem:[#allocation0]]
  $region54: #{adversarial_net_forward.1} parent=0
    _
  %s12 = ssub.s32 1, %s10
  %s13 = scalar_select 0, %s12, %s10
  %v14 = vstv %s6
  %15 = vst [vmem:[#allocation2] sm:$0x1] %v14
  $region1: #{adversarial_net_forward.1} parent=0
    #allocation3 [shape = 'u8[294912]{0}', space=vmem, size = 0x48000, scoped, tag = 'input window, operand 1, single buffered']
    #allocation4 [shape = 's32[1]{0}', space=sflag, size = 0x4, scoped, tag = 'scoped memory for adversarial_net_forward.1']
    #allocation5 [shape = 'u8[1048576]{0}', space=vmem, size = 0x100000, scoped, tag = 'input window, operand 3, single buffered']
    #allocation6 [shape = 's32[1]{0}', space=sflag, size = 0x4, scoped, tag = 'scoped memory for adversarial_net_forward.1']
    %16 = vsyncpa [#allocation4], 0
    %17 = vsyncpa [#allocation6], 0
    // Predicated region
    $region2: #{adversarial_net_forward.1} parent=1 // pred_check
      _
    $region3: #{adversarial_net_forward.1} parent=1 // pred_check_branch
      %19 = sbr.rel (0) target = $region5
    $region4: #{adversarial_net_forward.1} parent=1 // pred_region
      _
    $region5: #{adversarial_net_forward.1} parent=1 // pred_fallthru
      _
    // Predicated region
    $region6: #{adversarial_net_forward.1} parent=1 // pred_check
      _
    $region7: #{adversarial_net_forward.1} parent=1 // pred_check_branch
      %21 = sbr.rel (0) target = $region9
    $region8: #{adversarial_net_forward.1} parent=1 // pred_region
      %s23 = ssub.s32 9216, 9216
      %24 = vsyncadd [#allocation4], %s23
      %s25 = sshll.u32 [#allocation3], 4
      %s26 = int_to_ptr.vmem [resolvable:$true] %s25
      %31 = dma.hbm_to_vmem [thread:$0]  %s1, 9216, %s26, [#allocation4], 576, 576, 36
    $region9: #{adversarial_net_forward.1} parent=1 // pred_fallthru
      _
    // Predicated region
    $region10: #{adversarial_net_forward.1} parent=1 // pred_check
      _
    $region11: #{adversarial_net_forward.1} parent=1 // pred_check_branch
      %33 = sbr.rel (0) target = $region13
    $region12: #{adversarial_net_forward.1} parent=1 // pred_region
      _
    $region13: #{adversarial_net_forward.1} parent=1 // pred_fallthru
      _
    // Predicated region
    $region14: #{adversarial_net_forward.1} parent=1 // pred_check
      _
    $region15: #{adversarial_net_forward.1} parent=1 // pred_check_branch
      %35 = sbr.rel (0) target = $region17
    $region16: #{adversarial_net_forward.1} parent=1 // pred_region
      %s37 = ssub.s32 32768, 32768
      %38 = vsyncadd [#allocation6], %s37
      %s39 = sshll.u32 [#allocation5], 4
      %s40 = int_to_ptr.vmem [resolvable:$true] %s39
      %45 = dma.hbm_to_vmem [thread:$0]  %s3, 32768, %s40, [#allocation6], 256, 256, 16
    $region17: #{adversarial_net_forward.1} parent=1 // pred_fallthru
      _
    // Predicated region
    $region18: #{adversarial_net_forward.1} parent=1 // pred_check
      _
    $region19: #{adversarial_net_forward.1} parent=1 // pred_check_branch
      %47 = sbr.rel (0) target = $region21
    $region20: #{adversarial_net_forward.1} parent=1 // pred_region
      _
    $region21: #{adversarial_net_forward.1} parent=1 // pred_fallthru
      _
    // Predicated region
    $region22: #{adversarial_net_forward.1} parent=1 // pred_check
      _
    $region23: #{adversarial_net_forward.1} parent=1 // pred_check_branch
      %49 = sbr.rel (0) target = $region25
    $region24: #{adversarial_net_forward.1} parent=1 // pred_region
      _
    $region25: #{adversarial_net_forward.1} parent=1 // pred_fallthru
      _
    // Predicated region
    $region26: #{adversarial_net_forward.1} parent=1 // pred_check
      _
    $region27: #{adversarial_net_forward.1} parent=1 // pred_check_branch
      %51 = sbr.rel (0) target = $region29
    $region28: #{adversarial_net_forward.1} parent=1 // pred_region
      _
    $region29: #{adversarial_net_forward.1} parent=1 // pred_fallthru
      _
    // Predicated region
    $region30: #{adversarial_net_forward.1} parent=1 // pred_check
      _
    $region31: #{adversarial_net_forward.1} parent=1 // pred_check_branch
      %53 = sbr.rel (0) target = $region33
    $region32: #{adversarial_net_forward.1} parent=1 // pred_region
      %54 = dma.done [#allocation4], 9216
    $region33: #{adversarial_net_forward.1} parent=1 // pred_fallthru
      _
    // Predicated region
    $region34: #{adversarial_net_forward.1} parent=1 // pred_check
      _
    $region35: #{adversarial_net_forward.1} parent=1 // pred_check_branch
      %56 = sbr.rel (0) target = $region37
    $region36: #{adversarial_net_forward.1} parent=1 // pred_region
      %57 = dma.done [#allocation6], 32768
    $region37: #{adversarial_net_forward.1} parent=1 // pred_fallthru
      _
    %v59 = vld [vmem:[%s0] sm:$0xff]
    %v60 = vpack.c.bf16 %v59, %v59
    %v61 = vld [vmem:[#allocation3] sm:$0xff]
    %v62 = vld [vmem:[#allocation3 + $0x8] sm:$0xff]
    %v63 = vld [vmem:[#allocation3 + $0x10] sm:$0xff]
    %v64 = vld [vmem:[#allocation3 + $0x18] sm:$0xff]
    %v65 = vld [vmem:[#allocation3 + $0x20] sm:$0xf]
    %v66 = vld [vmem:[#allocation3 + $0x24] sm:$0xff]
    %v67 = vld [vmem:[#allocation3 + $0x2c] sm:$0xff]
    %v68 = vld [vmem:[#allocation3 + $0x34] sm:$0xff]
    %v69 = vld [vmem:[#allocation3 + $0x3c] sm:$0xff]
    %v70 = vld [vmem:[#allocation3 + $0x44] sm:$0xf]
    %v71 = vld [vmem:[#allocation3 + $0x48] sm:$0xff]
    %v72 = vld [vmem:[#allocation3 + $0x50] sm:$0xff]
    %v73 = vld [vmem:[#allocation3 + $0x58] sm:$0xff]
    %v74 = vld [vmem:[#allocation3 + $0x60] sm:$0xff]
    %v75 = vld [vmem:[#allocation3 + $0x68] sm:$0xf]
    %v76 = vld [vmem:[#allocation3 + $0x6c] sm:$0xff]
    %v77 = vld [vmem:[#allocation3 + $0x74] sm:$0xff]
    %v78 = vld [vmem:[#allocation3 + $0x7c] sm:$0xff]
    %v79 = vld [vmem:[#allocation3 + $0x84] sm:$0xff]
    %v80 = vld [vmem:[#allocation3 + $0x8c] sm:$0xf]
    %v81 = vld [vmem:[#allocation3 + $0x90] sm:$0xff]
    %v82 = vld [vmem:[#allocation3 + $0x98] sm:$0xff]
    %v83 = vld [vmem:[#allocation3 + $0xa0] sm:$0xff]
    %v84 = vld [vmem:[#allocation3 + $0xa8] sm:$0xff]
    %v85 = vld [vmem:[#allocation3 + $0xb0] sm:$0xf]
    %v86 = vld [vmem:[#allocation3 + $0xb4] sm:$0xff]
    %v87 = vld [vmem:[#allocation3 + $0xbc] sm:$0xff]
    %v88 = vld [vmem:[#allocation3 + $0xc4] sm:$0xff]
    %v89 = vld [vmem:[#allocation3 + $0xcc] sm:$0xff]
    %v90 = vld [vmem:[#allocation3 + $0xd4] sm:$0xf]
    %v91 = vld [vmem:[#allocation3 + $0xd8] sm:$0xff]
    %v92 = vld [vmem:[#allocation3 + $0xe0] sm:$0xff]
    %v93 = vld [vmem:[#allocation3 + $0xe8] sm:$0xff]
    %v94 = vld [vmem:[#allocation3 + $0xf0] sm:$0xff]
    %v95 = vld [vmem:[#allocation3 + $0xf8] sm:$0xf]
    %v96 = vld [vmem:[#allocation3 + $0xfc] sm:$0xff]
    %v97 = vld [vmem:[#allocation3 + $0x104] sm:$0xff]
    %v98 = vld [vmem:[#allocation3 + $0x10c] sm:$0xff]
    %v99 = vld [vmem:[#allocation3 + $0x114] sm:$0xff]
    %v100 = vld [vmem:[#allocation3 + $0x11c] sm:$0xf]
    %v101 = vld [vmem:[#allocation3 + $0x120] sm:$0xff]
    %v102 = vld [vmem:[#allocation3 + $0x128] sm:$0xff]
    %v103 = vld [vmem:[#allocation3 + $0x130] sm:$0xff]
    %v104 = vld [vmem:[#allocation3 + $0x138] sm:$0xff]
    %v105 = vld [vmem:[#allocation3 + $0x140] sm:$0xf]
    %v106 = vld [vmem:[#allocation3 + $0x144] sm:$0xff]
    %v107 = vld [vmem:[#allocation3 + $0x14c] sm:$0xff]
    %v108 = vld [vmem:[#allocation3 + $0x154] sm:$0xff]
    %v109 = vld [vmem:[#allocation3 + $0x15c] sm:$0xff]
    %v110 = vld [vmem:[#allocation3 + $0x164] sm:$0xf]
    %v111 = vld [vmem:[#allocation3 + $0x168] sm:$0xff]
    %v112 = vld [vmem:[#allocation3 + $0x170] sm:$0xff]
    %v113 = vld [vmem:[#allocation3 + $0x178] sm:$0xff]
    %v114 = vld [vmem:[#allocation3 + $0x180] sm:$0xff]
    %v115 = vld [vmem:[#allocation3 + $0x188] sm:$0xf]
    %v116 = vld [vmem:[#allocation3 + $0x18c] sm:$0xff]
    %v117 = vld [vmem:[#allocation3 + $0x194] sm:$0xff]
    %v118 = vld [vmem:[#allocation3 + $0x19c] sm:$0xff]
    %v119 = vld [vmem:[#allocation3 + $0x1a4] sm:$0xff]
    %v120 = vld [vmem:[#allocation3 + $0x1ac] sm:$0xf]
    %v121 = vld [vmem:[#allocation3 + $0x1b0] sm:$0xff]
    %v122 = vld [vmem:[#allocation3 + $0x1b8] sm:$0xff]
    %v123 = vld [vmem:[#allocation3 + $0x1c0] sm:$0xff]
    %v124 = vld [vmem:[#allocation3 + $0x1c8] sm:$0xff]
    %v125 = vld [vmem:[#allocation3 + $0x1d0] sm:$0xf]
    %v126 = vld [vmem:[#allocation3 + $0x1d4] sm:$0xff]
    %v127 = vld [vmem:[#allocation3 + $0x1dc] sm:$0xff]
    %v128 = vld [vmem:[#allocation3 + $0x1e4] sm:$0xff]
    %v129 = vld [vmem:[#allocation3 + $0x1ec] sm:$0xff]
    %v130 = vld [vmem:[#allocation3 + $0x1f4] sm:$0xf]
    %v131 = vld [vmem:[#allocation3 + $0x1f8] sm:$0xff]
    %v132 = vld [vmem:[#allocation3 + $0x200] sm:$0xff]
    %v133 = vld [vmem:[#allocation3 + $0x208] sm:$0xff]
    %v134 = vld [vmem:[#allocation3 + $0x210] sm:$0xff]
    %v135 = vld [vmem:[#allocation3 + $0x218] sm:$0xf]
    %v136 = vld [vmem:[#allocation3 + $0x21c] sm:$0xff]
    %v137 = vld [vmem:[#allocation3 + $0x224] sm:$0xff]
    %v138 = vld [vmem:[#allocation3 + $0x22c] sm:$0xff]
    %v139 = vld [vmem:[#allocation3 + $0x234] sm:$0xff]
    %v140 = vld [vmem:[#allocation3 + $0x23c] sm:$0xf]
    %v141 = vld [vmem:[%s2] sm:$0xff]
    %v142 = vld [vmem:[%s2 + $0x8] sm:$0x1]
    %v145 = vlaneseq
    %v146 = vshrl.u32 %v145, 7
    %v147 = vsub.s32 0, %v146
    %v148 = vrot.slane %v141, %v147
    %v149 = vlaneseq
    %v150 = vshrl.u32 %v149, 7
    %v151 = vsub.s32 1, %v150
    %v152 = vrot.slane %v141, %v151
    %v153 = vlaneseq
    %v154 = vshrl.u32 %v153, 7
    %v155 = vsub.s32 2, %v154
    %v156 = vrot.slane %v141, %v155
    %v157 = vlaneseq
    %v158 = vshrl.u32 %v157, 7
    %v159 = vsub.s32 3, %v158
    %v160 = vrot.slane %v141, %v159
    %v161 = vlaneseq
    %v162 = vshrl.u32 %v161, 7
    %v163 = vsub.s32 4, %v162
    %v164 = vrot.slane %v141, %v163
    %v165 = vlaneseq
    %v166 = vshrl.u32 %v165, 7
    %v167 = vsub.s32 5, %v166
    %v168 = vrot.slane %v141, %v167
    %v169 = vlaneseq
    %v170 = vshrl.u32 %v169, 7
    %v171 = vsub.s32 6, %v170
    %v172 = vrot.slane %v141, %v171
    %v173 = vlaneseq
    %v174 = vshrl.u32 %v173, 7
    %v175 = vsub.s32 7, %v174
    %v176 = vrot.slane %v141, %v175
    %v177 = vlaneseq
    %v178 = vshrl.u32 %v177, 7
    %v179 = vsub.s32 0, %v178
    %v180 = vrot.slane %v142, %v179
    %v270 = vunpack.c.l.b16 %v61
    %v271 = vunpack.c.h.b16 %v61
    %v272 = vunpack.c.l.b16 %v62
    %v273 = vunpack.c.h.b16 %v62
    %v274 = vunpack.c.l.b16 %v63
    %v275 = vunpack.c.h.b16 %v63
    %v276 = vunpack.c.l.b16 %v64
    %v277 = vunpack.c.h.b16 %v64
    %v278 = vunpack.c.l.b16 %v65
    %v279 = vunpack.c.l.b16 %v66
    %v280 = vunpack.c.h.b16 %v66
    %v281 = vunpack.c.l.b16 %v67
    %v282 = vunpack.c.h.b16 %v67
    %v283 = vunpack.c.l.b16 %v68
    %v284 = vunpack.c.h.b16 %v68
    %v285 = vunpack.c.l.b16 %v69
    %v286 = vunpack.c.h.b16 %v69
    %v287 = vunpack.c.l.b16 %v70
    %v288 = vunpack.c.l.b16 %v71
    %v289 = vunpack.c.h.b16 %v71
    %v290 = vunpack.c.l.b16 %v72
    %v291 = vunpack.c.h.b16 %v72
    %v292 = vunpack.c.l.b16 %v73
    %v293 = vunpack.c.h.b16 %v73
    %v294 = vunpack.c.l.b16 %v74
    %v295 = vunpack.c.h.b16 %v74
    %v296 = vunpack.c.l.b16 %v75
    %v297 = vunpack.c.l.b16 %v76
    %v298 = vunpack.c.h.b16 %v76
    %v299 = vunpack.c.l.b16 %v77
    %v300 = vunpack.c.h.b16 %v77
    %v301 = vunpack.c.l.b16 %v78
    %v302 = vunpack.c.h.b16 %v78
    %v303 = vunpack.c.l.b16 %v79
    %v304 = vunpack.c.h.b16 %v79
    %v305 = vunpack.c.l.b16 %v80
    %v306 = vunpack.c.l.b16 %v81
    %v307 = vunpack.c.h.b16 %v81
    %v308 = vunpack.c.l.b16 %v82
    %v309 = vunpack.c.h.b16 %v82
    %v310 = vunpack.c.l.b16 %v83
    %v311 = vunpack.c.h.b16 %v83
    %v312 = vunpack.c.l.b16 %v84
    %v313 = vunpack.c.h.b16 %v84
    %v314 = vunpack.c.l.b16 %v85
    %v315 = vunpack.c.l.b16 %v86
    %v316 = vunpack.c.h.b16 %v86
    %v317 = vunpack.c.l.b16 %v87
    %v318 = vunpack.c.h.b16 %v87
    %v319 = vunpack.c.l.b16 %v88
    %v320 = vunpack.c.h.b16 %v88
    %v321 = vunpack.c.l.b16 %v89
    %v322 = vunpack.c.h.b16 %v89
    %v323 = vunpack.c.l.b16 %v90
    %v324 = vunpack.c.l.b16 %v91
    %v325 = vunpack.c.h.b16 %v91
    %v326 = vunpack.c.l.b16 %v92
    %v327 = vunpack.c.h.b16 %v92
    %v328 = vunpack.c.l.b16 %v93
    %v329 = vunpack.c.h.b16 %v93
    %v330 = vunpack.c.l.b16 %v94
    %v331 = vunpack.c.h.b16 %v94
    %v332 = vunpack.c.l.b16 %v95
    %v333 = vunpack.c.l.b16 %v96
    %v334 = vunpack.c.h.b16 %v96
    %v335 = vunpack.c.l.b16 %v97
    %v336 = vunpack.c.h.b16 %v97
    %v337 = vunpack.c.l.b16 %v98
    %v338 = vunpack.c.h.b16 %v98
    %v339 = vunpack.c.l.b16 %v99
    %v340 = vunpack.c.h.b16 %v99
    %v341 = vunpack.c.l.b16 %v100
    %v342 = vunpack.c.l.b16 %v101
    %v343 = vunpack.c.h.b16 %v101
    %v344 = vunpack.c.l.b16 %v102
    %v345 = vunpack.c.h.b16 %v102
    %v346 = vunpack.c.l.b16 %v103
    %v347 = vunpack.c.h.b16 %v103
    %v348 = vunpack.c.l.b16 %v104
    %v349 = vunpack.c.h.b16 %v104
    %v350 = vunpack.c.l.b16 %v105
    %v351 = vunpack.c.l.b16 %v106
    %v352 = vunpack.c.h.b16 %v106
    %v353 = vunpack.c.l.b16 %v107
    %v354 = vunpack.c.h.b16 %v107
    %v355 = vunpack.c.l.b16 %v108
    %v356 = vunpack.c.h.b16 %v108
    %v357 = vunpack.c.l.b16 %v109
    %v358 = vunpack.c.h.b16 %v109
    %v359 = vunpack.c.l.b16 %v110
    %v360 = vunpack.c.l.b16 %v111
    %v361 = vunpack.c.h.b16 %v111
    %v362 = vunpack.c.l.b16 %v112
    %v363 = vunpack.c.h.b16 %v112
    %v364 = vunpack.c.l.b16 %v113
    %v365 = vunpack.c.h.b16 %v113
    %v366 = vunpack.c.l.b16 %v114
    %v367 = vunpack.c.h.b16 %v114
    %v368 = vunpack.c.l.b16 %v115
    %v369 = vunpack.c.l.b16 %v116
    %v370 = vunpack.c.h.b16 %v116
    %v371 = vunpack.c.l.b16 %v117
    %v372 = vunpack.c.h.b16 %v117
    %v373 = vunpack.c.l.b16 %v118
    %v374 = vunpack.c.h.b16 %v118
    %v375 = vunpack.c.l.b16 %v119
    %v376 = vunpack.c.h.b16 %v119
    %v377 = vunpack.c.l.b16 %v120
    %v378 = vunpack.c.l.b16 %v121
    %v379 = vunpack.c.h.b16 %v121
    %v380 = vunpack.c.l.b16 %v122
    %v381 = vunpack.c.h.b16 %v122
    %v382 = vunpack.c.l.b16 %v123
    %v383 = vunpack.c.h.b16 %v123
    %v384 = vunpack.c.l.b16 %v124
    %v385 = vunpack.c.h.b16 %v124
    %v386 = vunpack.c.l.b16 %v125
    %v387 = vunpack.c.l.b16 %v126
    %v388 = vunpack.c.h.b16 %v126
    %v389 = vunpack.c.l.b16 %v127
    %v390 = vunpack.c.h.b16 %v127
    %v391 = vunpack.c.l.b16 %v128
    %v392 = vunpack.c.h.b16 %v128
    %v393 = vunpack.c.l.b16 %v129
    %v394 = vunpack.c.h.b16 %v129
    %v395 = vunpack.c.l.b16 %v130
    %v396 = vunpack.c.l.b16 %v131
    %v397 = vunpack.c.h.b16 %v131
    %v398 = vunpack.c.l.b16 %v132
    %v399 = vunpack.c.h.b16 %v132
    %v400 = vunpack.c.l.b16 %v133
    %v401 = vunpack.c.h.b16 %v133
    %v402 = vunpack.c.l.b16 %v134
    %v403 = vunpack.c.h.b16 %v134
    %v404 = vunpack.c.l.b16 %v135
    %v405 = vunpack.c.l.b16 %v136
    %v406 = vunpack.c.h.b16 %v136
    %v407 = vunpack.c.l.b16 %v137
    %v408 = vunpack.c.h.b16 %v137
    %v409 = vunpack.c.l.b16 %v138
    %v410 = vunpack.c.h.b16 %v138
    %v411 = vunpack.c.l.b16 %v139
    %v412 = vunpack.c.h.b16 %v139
    %v413 = vunpack.c.l.b16 %v140
    %v414 = vpack.c.b16 %v279, %v270
    %v415 = vpack.c.b16 %v280, %v271
    %v416 = vpack.c.b16 %v281, %v272
    %v417 = vpack.c.b16 %v282, %v273
    %v418 = vpack.c.b16 %v283, %v274
    %v419 = vpack.c.b16 %v284, %v275
    %v420 = vpack.c.b16 %v285, %v276
    %v421 = vpack.c.b16 %v286, %v277
    %v422 = vpack.c.b16 %v287, %v278
    %v423 = vpack.c.b16 %v297, %v288
    %v424 = vpack.c.b16 %v298, %v289
    %v425 = vpack.c.b16 %v299, %v290
    %v426 = vpack.c.b16 %v300, %v291
    %v427 = vpack.c.b16 %v301, %v292
    %v428 = vpack.c.b16 %v302, %v293
    %v429 = vpack.c.b16 %v303, %v294
    %v430 = vpack.c.b16 %v304, %v295
    %v431 = vpack.c.b16 %v305, %v296
    %v432 = vpack.c.b16 %v315, %v306
    %v433 = vpack.c.b16 %v316, %v307
    %v434 = vpack.c.b16 %v317, %v308
    %v435 = vpack.c.b16 %v318, %v309
    %v436 = vpack.c.b16 %v319, %v310
    %v437 = vpack.c.b16 %v320, %v311
    %v438 = vpack.c.b16 %v321, %v312
    %v439 = vpack.c.b16 %v322, %v313
    %v440 = vpack.c.b16 %v323, %v314
    %v441 = vpack.c.b16 %v333, %v324
    %v442 = vpack.c.b16 %v334, %v325
    %v443 = vpack.c.b16 %v335, %v326
    %v444 = vpack.c.b16 %v336, %v327
    %v445 = vpack.c.b16 %v337, %v328
    %v446 = vpack.c.b16 %v338, %v329
    %v447 = vpack.c.b16 %v339, %v330
    %v448 = vpack.c.b16 %v340, %v331
    %v449 = vpack.c.b16 %v341, %v332
    %v450 = vpack.c.b16 %v351, %v342
    %v451 = vpack.c.b16 %v352, %v343
    %v452 = vpack.c.b16 %v353, %v344
    %v453 = vpack.c.b16 %v354, %v345
    %v454 = vpack.c.b16 %v355, %v346
    %v455 = vpack.c.b16 %v356, %v347
    %v456 = vpack.c.b16 %v357, %v348
    %v457 = vpack.c.b16 %v358, %v349
    %v458 = vpack.c.b16 %v359, %v350
    %v459 = vpack.c.b16 %v369, %v360
    %v460 = vpack.c.b16 %v370, %v361
    %v461 = vpack.c.b16 %v371, %v362
    %v462 = vpack.c.b16 %v372, %v363
    %v463 = vpack.c.b16 %v373, %v364
    %v464 = vpack.c.b16 %v374, %v365
    %v465 = vpack.c.b16 %v375, %v366
    %v466 = vpack.c.b16 %v376, %v367
    %v467 = vpack.c.b16 %v377, %v368
    %v468 = vpack.c.b16 %v387, %v378
    %v469 = vpack.c.b16 %v388, %v379
    %v470 = vpack.c.b16 %v389, %v380
    %v471 = vpack.c.b16 %v390, %v381
    %v472 = vpack.c.b16 %v391, %v382
    %v473 = vpack.c.b16 %v392, %v383
    %v474 = vpack.c.b16 %v393, %v384
    %v475 = vpack.c.b16 %v394, %v385
    %v476 = vpack.c.b16 %v395, %v386
    %v477 = vpack.c.b16 %v405, %v396
    %v478 = vpack.c.b16 %v406, %v397
    %v479 = vpack.c.b16 %v407, %v398
    %v480 = vpack.c.b16 %v408, %v399
    %v481 = vpack.c.b16 %v409, %v400
    %v482 = vpack.c.b16 %v410, %v401
    %v483 = vpack.c.b16 %v411, %v402
    %v484 = vpack.c.b16 %v412, %v403
    %v485 = vpack.c.b16 %v413, %v404
    %558 = vmatprep.subr.bf16.mxu0 %v415
    %559 = vmatpush1.bf16.msra.mxu0 %v414
    %560 = vmatprep.subr.bf16.mxu0 %v424
    %561 = vmatpush1.bf16.msra.mxu0 %v423
    %562 = vmatprep.subr.bf16.mxu0 %v433
    %563 = vmatpush1.bf16.msra.mxu0 %v432
    %564 = vmatprep.subr.bf16.mxu0 %v442
    %565 = vmatpush1.bf16.msra.mxu0 %v441
    %566 = vmatprep.subr.bf16.mxu0 %v451
    %567 = vmatpush1.bf16.msra.mxu0 %v450
    %568 = vmatprep.subr.bf16.mxu0 %v460
    %569 = vmatpush1.bf16.msra.mxu0 %v459
    %570 = vmatprep.subr.bf16.mxu0 %v469
    %571 = vmatpush1.bf16.msra.mxu0 %v468
    %572 = vmatprep.subr.bf16.mxu0 %v478
    %573 = vmatpush1.bf16.msra.mxu0 %v477
    %574 = vmatprep.subr.bf16.mxu0 0
    %575 = vmatpush1.bf16.msra.mxu0 0
    %576 = vmatprep.subr.bf16.mxu0 0
    %577 = vmatpush1.bf16.msra.mxu0 0
    %578 = vmatprep.subr.bf16.mxu0 0
    %579 = vmatpush1.bf16.msra.mxu0 0
    %580 = vmatprep.subr.bf16.mxu0 0
    %581 = vmatpush1.bf16.msra.mxu0 0
    %582 = vmatprep.subr.bf16.mxu0 0
    %583 = vmatpush1.bf16.msra.mxu0 0
    %584 = vmatprep.subr.bf16.mxu0 0
    %585 = vmatpush1.bf16.msra.mxu0 0
    %586 = vmatprep.subr.bf16.mxu0 0
    %587 = vmatpush1.bf16.msra.mxu0 0
    %588 = vmatprep.subr.bf16.mxu0 0
    %589 = vmatpush1.bf16.msra.mxu0 0
    %590 = vmatprep.mubr.bf16.mxu0 0
    %591 = vmatmul.mubr.bf16.gmra.mrb[0].mxu0 %v60
    %v592 = vpop.f32.mrb[0].mxu0
    %v593 = vadd.f32 %v148, %v592
    %v594 = vpop.f32.mrb[0].mxu0
    %v595 = vadd.f32 %v152, %v594
    %v596 = vpop.f32.mrb[0].mxu0
    %v597 = vpop.f32.mrb[0].mxu0
    %598 = vdwg.mxu0
    %599 = vmatprep.subr.bf16.mxu0 %v417
    %600 = vmatpush1.bf16.msra.mxu0 %v416
    %601 = vmatprep.subr.bf16.mxu0 %v426
    %602 = vmatpush1.bf16.msra.mxu0 %v425
    %603 = vmatprep.subr.bf16.mxu0 %v435
    %604 = vmatpush1.bf16.msra.mxu0 %v434
    %605 = vmatprep.subr.bf16.mxu0 %v444
    %606 = vmatpush1.bf16.msra.mxu0 %v443
    %607 = vmatprep.subr.bf16.mxu0 %v453
    %608 = vmatpush1.bf16.msra.mxu0 %v452
    %609 = vmatprep.subr.bf16.mxu0 %v462
    %610 = vmatpush1.bf16.msra.mxu0 %v461
    %611 = vmatprep.subr.bf16.mxu0 %v471
    %612 = vmatpush1.bf16.msra.mxu0 %v470
    %613 = vmatprep.subr.bf16.mxu0 %v480
    %614 = vmatpush1.bf16.msra.mxu0 %v479
    %615 = vmatprep.subr.bf16.mxu0 0
    %616 = vmatpush1.bf16.msra.mxu0 0
    %617 = vmatprep.subr.bf16.mxu0 0
    %618 = vmatpush1.bf16.msra.mxu0 0
    %619 = vmatprep.subr.bf16.mxu0 0
    %620 = vmatpush1.bf16.msra.mxu0 0
    %621 = vmatprep.subr.bf16.mxu0 0
    %622 = vmatpush1.bf16.msra.mxu0 0
    %623 = vmatprep.subr.bf16.mxu0 0
    %624 = vmatpush1.bf16.msra.mxu0 0
    %625 = vmatprep.subr.bf16.mxu0 0
    %626 = vmatpush1.bf16.msra.mxu0 0
    %627 = vmatprep.subr.bf16.mxu0 0
    %628 = vmatpush1.bf16.msra.mxu0 0
    %629 = vmatprep.subr.bf16.mxu0 0
    %630 = vmatpush1.bf16.msra.mxu0 0
    %631 = vmatprep.mubr.bf16.mxu0 0
    %632 = vmatmul.mubr.bf16.gmra.mrb[0].mxu0 %v60
    %v633 = vpop.f32.mrb[0].mxu0
    %v634 = vadd.f32 %v156, %v633
    %v635 = vpop.f32.mrb[0].mxu0
    %v636 = vadd.f32 %v160, %v635
    %v637 = vpop.f32.mrb[0].mxu0
    %v638 = vpop.f32.mrb[0].mxu0
    %639 = vdwg.mxu0
    %640 = vmatprep.subr.bf16.mxu0 %v419
    %641 = vmatpush1.bf16.msra.mxu0 %v418
    %642 = vmatprep.subr.bf16.mxu0 %v428
    %643 = vmatpush1.bf16.msra.mxu0 %v427
    %644 = vmatprep.subr.bf16.mxu0 %v437
    %645 = vmatpush1.bf16.msra.mxu0 %v436
    %646 = vmatprep.subr.bf16.mxu0 %v446
    %647 = vmatpush1.bf16.msra.mxu0 %v445
    %648 = vmatprep.subr.bf16.mxu0 %v455
    %649 = vmatpush1.bf16.msra.mxu0 %v454
    %650 = vmatprep.subr.bf16.mxu0 %v464
    %651 = vmatpush1.bf16.msra.mxu0 %v463
    %652 = vmatprep.subr.bf16.mxu0 %v473
    %653 = vmatpush1.bf16.msra.mxu0 %v472
    %654 = vmatprep.subr.bf16.mxu0 %v482
    %655 = vmatpush1.bf16.msra.mxu0 %v481
    %656 = vmatprep.subr.bf16.mxu0 0
    %657 = vmatpush1.bf16.msra.mxu0 0
    %658 = vmatprep.subr.bf16.mxu0 0
    %659 = vmatpush1.bf16.msra.mxu0 0
    %660 = vmatprep.subr.bf16.mxu0 0
    %661 = vmatpush1.bf16.msra.mxu0 0
    %662 = vmatprep.subr.bf16.mxu0 0
    %663 = vmatpush1.bf16.msra.mxu0 0
    %664 = vmatprep.subr.bf16.mxu0 0
    %665 = vmatpush1.bf16.msra.mxu0 0
    %666 = vmatprep.subr.bf16.mxu0 0
    %667 = vmatpush1.bf16.msra.mxu0 0
    %668 = vmatprep.subr.bf16.mxu0 0
    %669 = vmatpush1.bf16.msra.mxu0 0
    %670 = vmatprep.subr.bf16.mxu0 0
    %671 = vmatpush1.bf16.msra.mxu0 0
    %672 = vmatprep.mubr.bf16.mxu0 0
    %673 = vmatmul.mubr.bf16.gmra.mrb[0].mxu0 %v60
    %v674 = vpop.f32.mrb[0].mxu0
    %v675 = vadd.f32 %v164, %v674
    %v676 = vpop.f32.mrb[0].mxu0
    %v677 = vadd.f32 %v168, %v676
    %v678 = vpop.f32.mrb[0].mxu0
    %v679 = vpop.f32.mrb[0].mxu0
    %680 = vdwg.mxu0
    %681 = vmatprep.subr.bf16.mxu0 %v421
    %682 = vmatpush1.bf16.msra.mxu0 %v420
    %683 = vmatprep.subr.bf16.mxu0 %v430
    %684 = vmatpush1.bf16.msra.mxu0 %v429
    %685 = vmatprep.subr.bf16.mxu0 %v439
    %686 = vmatpush1.bf16.msra.mxu0 %v438
    %687 = vmatprep.subr.bf16.mxu0 %v448
    %688 = vmatpush1.bf16.msra.mxu0 %v447
    %689 = vmatprep.subr.bf16.mxu0 %v457
    %690 = vmatpush1.bf16.msra.mxu0 %v456
    %691 = vmatprep.subr.bf16.mxu0 %v466
    %692 = vmatpush1.bf16.msra.mxu0 %v465
    %693 = vmatprep.subr.bf16.mxu0 %v475
    %694 = vmatpush1.bf16.msra.mxu0 %v474
    %695 = vmatprep.subr.bf16.mxu0 %v484
    %696 = vmatpush1.bf16.msra.mxu0 %v483
    %697 = vmatprep.subr.bf16.mxu0 0
    %698 = vmatpush1.bf16.msra.mxu0 0
    %699 = vmatprep.subr.bf16.mxu0 0
    %700 = vmatpush1.bf16.msra.mxu0 0
    %701 = vmatprep.subr.bf16.mxu0 0
    %702 = vmatpush1.bf16.msra.mxu0 0
    %703 = vmatprep.subr.bf16.mxu0 0
    %704 = vmatpush1.bf16.msra.mxu0 0
    %705 = vmatprep.subr.bf16.mxu0 0
    %706 = vmatpush1.bf16.msra.mxu0 0
    %707 = vmatprep.subr.bf16.mxu0 0
    %708 = vmatpush1.bf16.msra.mxu0 0
    %709 = vmatprep.subr.bf16.mxu0 0
    %710 = vmatpush1.bf16.msra.mxu0 0
    %711 = vmatprep.subr.bf16.mxu0 0
    %712 = vmatpush1.bf16.msra.mxu0 0
    %713 = vmatprep.mubr.bf16.mxu0 0
    %714 = vmatmul.mubr.bf16.gmra.mrb[0].mxu0 %v60
    %v715 = vpop.f32.mrb[0].mxu0
    %v716 = vadd.f32 %v172, %v715
    %v717 = vpop.f32.mrb[0].mxu0
    %v718 = vadd.f32 %v176, %v717
    %v719 = vpop.f32.mrb[0].mxu0
    %v720 = vpop.f32.mrb[0].mxu0
    %721 = vdwg.mxu0
    %722 = vmatprep.subr.bf16.mxu0 0
    %723 = vmatpush1.bf16.msra.mxu0 %v422
    %724 = vmatprep.subr.bf16.mxu0 0
    %725 = vmatpush1.bf16.msra.mxu0 %v431
    %726 = vmatprep.subr.bf16.mxu0 0
    %727 = vmatpush1.bf16.msra.mxu0 %v440
    %728 = vmatprep.subr.bf16.mxu0 0
    %729 = vmatpush1.bf16.msra.mxu0 %v449
    %730 = vmatprep.subr.bf16.mxu0 0
    %731 = vmatpush1.bf16.msra.mxu0 %v458
    %732 = vmatprep.subr.bf16.mxu0 0
    %733 = vmatpush1.bf16.msra.mxu0 %v467
    %734 = vmatprep.subr.bf16.mxu0 0
    %735 = vmatpush1.bf16.msra.mxu0 %v476
    %736 = vmatprep.subr.bf16.mxu0 0
    %737 = vmatpush1.bf16.msra.mxu0 %v485
    %738 = vmatprep.subr.bf16.mxu0 0
    %739 = vmatpush1.bf16.msra.mxu0 0
    %740 = vmatprep.subr.bf16.mxu0 0
    %741 = vmatpush1.bf16.msra.mxu0 0
    %742 = vmatprep.subr.bf16.mxu0 0
    %743 = vmatpush1.bf16.msra.mxu0 0
    %744 = vmatprep.subr.bf16.mxu0 0
    %745 = vmatpush1.bf16.msra.mxu0 0
    %746 = vmatprep.subr.bf16.mxu0 0
    %747 = vmatpush1.bf16.msra.mxu0 0
    %748 = vmatprep.subr.bf16.mxu0 0
    %749 = vmatpush1.bf16.msra.mxu0 0
    %750 = vmatprep.subr.bf16.mxu0 0
    %751 = vmatpush1.bf16.msra.mxu0 0
    %752 = vmatprep.subr.bf16.mxu0 0
    %753 = vmatpush1.bf16.msra.mxu0 0
    %754 = vmatprep.mubr.bf16.mxu0 0
    %755 = vmatmul.mubr.bf16.gmra.mrb[0].mxu0 %v60
    %v756 = vpop.f32.mrb[0].mxu0
    %v757 = vadd.f32 %v180, %v756
    %v758 = vpop.f32.mrb[0].mxu0
    %v759 = vpop.f32.mrb[0].mxu0
    %v760 = vpop.f32.mrb[0].mxu0
    %761 = vdwg.mxu0
    %762 = vst [vmem:[%s7] sm:$0xff] %v593
    %v763 = vmax.f32 %v595, 0.0
    %v764 = vmax.f32 %v634, 0.0
    %v765 = vmax.f32 %v636, 0.0
    %v766 = vmax.f32 %v675, 0.0
    %v767 = vmax.f32 %v677, 0.0
    %v768 = vmax.f32 %v716, 0.0
    %v769 = vmax.f32 %v718, 0.0
    %v770 = vmax.f32 %v757, 0.0
    %v771 = vpack.c.bf16 %v763, %v763
    %v772 = vpack.c.bf16 %v764, %v764
    %v773 = vpack.c.bf16 %v765, %v765
    %v774 = vpack.c.bf16 %v766, %v766
    %v775 = vpack.c.bf16 %v767, %v767
    %v776 = vpack.c.bf16 %v768, %v768
    %v777 = vpack.c.bf16 %v769, %v769
    %v778 = vpack.c.bf16 %v770, %v770
    %v779 = vld [vmem:[#allocation5] sm:$0xff]
    %v780 = vld [vmem:[#allocation5 + $0x8] sm:$0xff]
    %v781 = vld [vmem:[#allocation5 + $0x10] sm:$0xff]
    %v782 = vld [vmem:[#allocation5 + $0x18] sm:$0xff]
    %v783 = vld [vmem:[#allocation5 + $0x20] sm:$0xff]
    %v784 = vld [vmem:[#allocation5 + $0x28] sm:$0xff]
    %v785 = vld [vmem:[#allocation5 + $0x30] sm:$0xff]
    %v786 = vld [vmem:[#allocation5 + $0x38] sm:$0xff]
    %v787 = vld [vmem:[#allocation5 + $0x40] sm:$0xff]
    %v788 = vld [vmem:[#allocation5 + $0x48] sm:$0xff]
    %v789 = vld [vmem:[#allocation5 + $0x50] sm:$0xff]
    %v790 = vld [vmem:[#allocation5 + $0x58] sm:$0xff]
    %v791 = vld [vmem:[#allocation5 + $0x60] sm:$0xff]
    %v792 = vld [vmem:[#allocation5 + $0x68] sm:$0xff]
    %v793 = vld [vmem:[#allocation5 + $0x70] sm:$0xff]
    %v794 = vld [vmem:[#allocation5 + $0x78] sm:$0xff]
    %v795 = vld [vmem:[#allocation5 + $0x80] sm:$0xff]
    %v796 = vld [vmem:[#allocation5 + $0x88] sm:$0xff]
    %v797 = vld [vmem:[#allocation5 + $0x90] sm:$0xff]
    %v798 = vld [vmem:[#allocation5 + $0x98] sm:$0xff]
    %v799 = vld [vmem:[#allocation5 + $0xa0] sm:$0xff]
    %v800 = vld [vmem:[#allocation5 + $0xa8] sm:$0xff]
    %v801 = vld [vmem:[#allocation5 + $0xb0] sm:$0xff]
    %v802 = vld [vmem:[#allocation5 + $0xb8] sm:$0xff]
    %v803 = vld [vmem:[#allocation5 + $0xc0] sm:$0xff]
    %v804 = vld [vmem:[#allocation5 + $0xc8] sm:$0xff]
    %v805 = vld [vmem:[#allocation5 + $0xd0] sm:$0xff]
    %v806 = vld [vmem:[#allocation5 + $0xd8] sm:$0xff]
    %v807 = vld [vmem:[#allocation5 + $0xe0] sm:$0xff]
    %v808 = vld [vmem:[#allocation5 + $0xe8] sm:$0xff]
    %v809 = vld [vmem:[#allocation5 + $0xf0] sm:$0xff]
    %v810 = vld [vmem:[#allocation5 + $0xf8] sm:$0xff]
    %v811 = vld [vmem:[#allocation5 + $0x100] sm:$0xff]
    %v812 = vld [vmem:[#allocation5 + $0x108] sm:$0xff]
    %v813 = vld [vmem:[#allocation5 + $0x110] sm:$0xff]
    %v814 = vld [vmem:[#allocation5 + $0x118] sm:$0xff]
    %v815 = vld [vmem:[#allocation5 + $0x120] sm:$0xff]
    %v816 = vld [vmem:[#allocation5 + $0x128] sm:$0xff]
    %v817 = vld [vmem:[#allocation5 + $0x130] sm:$0xff]
    %v818 = vld [vmem:[#allocation5 + $0x138] sm:$0xff]
    %v819 = vld [vmem:[#allocation5 + $0x140] sm:$0xff]
    %v820 = vld [vmem:[#allocation5 + $0x148] sm:$0xff]
    %v821 = vld [vmem:[#allocation5 + $0x150] sm:$0xff]
    %v822 = vld [vmem:[#allocation5 + $0x158] sm:$0xff]
    %v823 = vld [vmem:[#allocation5 + $0x160] sm:$0xff]
    %v824 = vld [vmem:[#allocation5 + $0x168] sm:$0xff]
    %v825 = vld [vmem:[#allocation5 + $0x170] sm:$0xff]
    %v826 = vld [vmem:[#allocation5 + $0x178] sm:$0xff]
    %v827 = vld [vmem:[#allocation5 + $0x180] sm:$0xff]
    %v828 = vld [vmem:[#allocation5 + $0x188] sm:$0xff]
    %v829 = vld [vmem:[#allocation5 + $0x190] sm:$0xff]
    %v830 = vld [vmem:[#allocation5 + $0x198] sm:$0xff]
    %v831 = vld [vmem:[#allocation5 + $0x1a0] sm:$0xff]
    %v832 = vld [vmem:[#allocation5 + $0x1a8] sm:$0xff]
    %v833 = vld [vmem:[#allocation5 + $0x1b0] sm:$0xff]
    %v834 = vld [vmem:[#allocation5 + $0x1b8] sm:$0xff]
    %v835 = vld [vmem:[#allocation5 + $0x1c0] sm:$0xff]
    %v836 = vld [vmem:[#allocation5 + $0x1c8] sm:$0xff]
    %v837 = vld [vmem:[#allocation5 + $0x1d0] sm:$0xff]
    %v838 = vld [vmem:[#allocation5 + $0x1d8] sm:$0xff]
    %v839 = vld [vmem:[#allocation5 + $0x1e0] sm:$0xff]
    %v840 = vld [vmem:[#allocation5 + $0x1e8] sm:$0xff]
    %v841 = vld [vmem:[#allocation5 + $0x1f0] sm:$0xff]
    %v842 = vld [vmem:[#allocation5 + $0x1f8] sm:$0xff]
    %v843 = vld [vmem:[#allocation5 + $0x200] sm:$0xff]
    %v844 = vld [vmem:[#allocation5 + $0x208] sm:$0xff]
    %v845 = vld [vmem:[#allocation5 + $0x210] sm:$0xff]
    %v846 = vld [vmem:[#allocation5 + $0x218] sm:$0xff]
    %v847 = vld [vmem:[#allocation5 + $0x220] sm:$0xff]
    %v848 = vld [vmem:[#allocation5 + $0x228] sm:$0xff]
    %v849 = vld [vmem:[#allocation5 + $0x230] sm:$0xff]
    %v850 = vld [vmem:[#allocation5 + $0x238] sm:$0xff]
    %v851 = vld [vmem:[#allocation5 + $0x240] sm:$0xff]
    %v852 = vld [vmem:[#allocation5 + $0x248] sm:$0xff]
    %v853 = vld [vmem:[#allocation5 + $0x250] sm:$0xff]
    %v854 = vld [vmem:[#allocation5 + $0x258] sm:$0xff]
    %v855 = vld [vmem:[#allocation5 + $0x260] sm:$0xff]
    %v856 = vld [vmem:[#allocation5 + $0x268] sm:$0xff]
    %v857 = vld [vmem:[#allocation5 + $0x270] sm:$0xff]
    %v858 = vld [vmem:[#allocation5 + $0x278] sm:$0xff]
    %v859 = vld [vmem:[#allocation5 + $0x280] sm:$0xff]
    %v860 = vld [vmem:[#allocation5 + $0x288] sm:$0xff]
    %v861 = vld [vmem:[#allocation5 + $0x290] sm:$0xff]
    %v862 = vld [vmem:[#allocation5 + $0x298] sm:$0xff]
    %v863 = vld [vmem:[#allocation5 + $0x2a0] sm:$0xff]
    %v864 = vld [vmem:[#allocation5 + $0x2a8] sm:$0xff]
    %v865 = vld [vmem:[#allocation5 + $0x2b0] sm:$0xff]
    %v866 = vld [vmem:[#allocation5 + $0x2b8] sm:$0xff]
    %v867 = vld [vmem:[#allocation5 + $0x2c0] sm:$0xff]
    %v868 = vld [vmem:[#allocation5 + $0x2c8] sm:$0xff]
    %v869 = vld [vmem:[#allocation5 + $0x2d0] sm:$0xff]
    %v870 = vld [vmem:[#allocation5 + $0x2d8] sm:$0xff]
    %v871 = vld [vmem:[#allocation5 + $0x2e0] sm:$0xff]
    %v872 = vld [vmem:[#allocation5 + $0x2e8] sm:$0xff]
    %v873 = vld [vmem:[#allocation5 + $0x2f0] sm:$0xff]
    %v874 = vld [vmem:[#allocation5 + $0x2f8] sm:$0xff]
    %v875 = vld [vmem:[#allocation5 + $0x300] sm:$0xff]
    %v876 = vld [vmem:[#allocation5 + $0x308] sm:$0xff]
    %v877 = vld [vmem:[#allocation5 + $0x310] sm:$0xff]
    %v878 = vld [vmem:[#allocation5 + $0x318] sm:$0xff]
    %v879 = vld [vmem:[#allocation5 + $0x320] sm:$0xff]
    %v880 = vld [vmem:[#allocation5 + $0x328] sm:$0xff]
    %v881 = vld [vmem:[#allocation5 + $0x330] sm:$0xff]
    %v882 = vld [vmem:[#allocation5 + $0x338] sm:$0xff]
    %v883 = vld [vmem:[#allocation5 + $0x340] sm:$0xff]
    %v884 = vld [vmem:[#allocation5 + $0x348] sm:$0xff]
    %v885 = vld [vmem:[#allocation5 + $0x350] sm:$0xff]
    %v886 = vld [vmem:[#allocation5 + $0x358] sm:$0xff]
    %v887 = vld [vmem:[#allocation5 + $0x360] sm:$0xff]
    %v888 = vld [vmem:[#allocation5 + $0x368] sm:$0xff]
    %v889 = vld [vmem:[#allocation5 + $0x370] sm:$0xff]
    %v890 = vld [vmem:[#allocation5 + $0x378] sm:$0xff]
    %v891 = vld [vmem:[#allocation5 + $0x380] sm:$0xff]
    %v892 = vld [vmem:[#allocation5 + $0x388] sm:$0xff]
    %v893 = vld [vmem:[#allocation5 + $0x390] sm:$0xff]
    %v894 = vld [vmem:[#allocation5 + $0x398] sm:$0xff]
    %v895 = vld [vmem:[#allocation5 + $0x3a0] sm:$0xff]
    %v896 = vld [vmem:[#allocation5 + $0x3a8] sm:$0xff]
    %v897 = vld [vmem:[#allocation5 + $0x3b0] sm:$0xff]
    %v898 = vld [vmem:[#allocation5 + $0x3b8] sm:$0xff]
    %v899 = vld [vmem:[#allocation5 + $0x3c0] sm:$0xff]
    %v900 = vld [vmem:[#allocation5 + $0x3c8] sm:$0xff]
    %v901 = vld [vmem:[#allocation5 + $0x3d0] sm:$0xff]
    %v902 = vld [vmem:[#allocation5 + $0x3d8] sm:$0xff]
    %v903 = vld [vmem:[#allocation5 + $0x3e0] sm:$0xff]
    %v904 = vld [vmem:[#allocation5 + $0x3e8] sm:$0xff]
    %v905 = vld [vmem:[#allocation5 + $0x3f0] sm:$0xff]
    %v906 = vld [vmem:[#allocation5 + $0x3f8] sm:$0xff]
    %v907 = vld [vmem:[#allocation5 + $0x400] sm:$0xff]
    %v908 = vld [vmem:[#allocation5 + $0x408] sm:$0xff]
    %v909 = vld [vmem:[#allocation5 + $0x410] sm:$0xff]
    %v910 = vld [vmem:[#allocation5 + $0x418] sm:$0xff]
    %v911 = vld [vmem:[#allocation5 + $0x420] sm:$0xff]
    %v912 = vld [vmem:[#allocation5 + $0x428] sm:$0xff]
    %v913 = vld [vmem:[#allocation5 + $0x430] sm:$0xff]
    %v914 = vld [vmem:[#allocation5 + $0x438] sm:$0xff]
    %v915 = vld [vmem:[#allocation5 + $0x440] sm:$0xff]
    %v916 = vld [vmem:[#allocation5 + $0x448] sm:$0xff]
    %v917 = vld [vmem:[#allocation5 + $0x450] sm:$0xff]
    %v918 = vld [vmem:[#allocation5 + $0x458] sm:$0xff]
    %v919 = vld [vmem:[#allocation5 + $0x460] sm:$0xff]
    %v920 = vld [vmem:[#allocation5 + $0x468] sm:$0xff]
    %v921 = vld [vmem:[#allocation5 + $0x470] sm:$0xff]
    %v922 = vld [vmem:[#allocation5 + $0x478] sm:$0xff]
    %v923 = vld [vmem:[#allocation5 + $0x480] sm:$0xff]
    %v924 = vld [vmem:[#allocation5 + $0x488] sm:$0xff]
    %v925 = vld [vmem:[#allocation5 + $0x490] sm:$0xff]
    %v926 = vld [vmem:[#allocation5 + $0x498] sm:$0xff]
    %v927 = vld [vmem:[#allocation5 + $0x4a0] sm:$0xff]
    %v928 = vld [vmem:[#allocation5 + $0x4a8] sm:$0xff]
    %v929 = vld [vmem:[#allocation5 + $0x4b0] sm:$0xff]
    %v930 = vld [vmem:[#allocation5 + $0x4b8] sm:$0xff]
    %v931 = vld [vmem:[#allocation5 + $0x4c0] sm:$0xff]
    %v932 = vld [vmem:[#allocation5 + $0x4c8] sm:$0xff]
    %v933 = vld [vmem:[#allocation5 + $0x4d0] sm:$0xff]
    %v934 = vld [vmem:[#allocation5 + $0x4d8] sm:$0xff]
    %v935 = vld [vmem:[#allocation5 + $0x4e0] sm:$0xff]
    %v936 = vld [vmem:[#allocation5 + $0x4e8] sm:$0xff]
    %v937 = vld [vmem:[#allocation5 + $0x4f0] sm:$0xff]
    %v938 = vld [vmem:[#allocation5 + $0x4f8] sm:$0xff]
    %v939 = vld [vmem:[#allocation5 + $0x500] sm:$0xff]
    %v940 = vld [vmem:[#allocation5 + $0x508] sm:$0xff]
    %v941 = vld [vmem:[#allocation5 + $0x510] sm:$0xff]
    %v942 = vld [vmem:[#allocation5 + $0x518] sm:$0xff]
    %v943 = vld [vmem:[#allocation5 + $0x520] sm:$0xff]
    %v944 = vld [vmem:[#allocation5 + $0x528] sm:$0xff]
    %v945 = vld [vmem:[#allocation5 + $0x530] sm:$0xff]
    %v946 = vld [vmem:[#allocation5 + $0x538] sm:$0xff]
    %v947 = vld [vmem:[#allocation5 + $0x540] sm:$0xff]
    %v948 = vld [vmem:[#allocation5 + $0x548] sm:$0xff]
    %v949 = vld [vmem:[#allocation5 + $0x550] sm:$0xff]
    %v950 = vld [vmem:[#allocation5 + $0x558] sm:$0xff]
    %v951 = vld [vmem:[#allocation5 + $0x560] sm:$0xff]
    %v952 = vld [vmem:[#allocation5 + $0x568] sm:$0xff]
    %v953 = vld [vmem:[#allocation5 + $0x570] sm:$0xff]
    %v954 = vld [vmem:[#allocation5 + $0x578] sm:$0xff]
    %v955 = vld [vmem:[#allocation5 + $0x580] sm:$0xff]
    %v956 = vld [vmem:[#allocation5 + $0x588] sm:$0xff]
    %v957 = vld [vmem:[#allocation5 + $0x590] sm:$0xff]
    %v958 = vld [vmem:[#allocation5 + $0x598] sm:$0xff]
    %v959 = vld [vmem:[#allocation5 + $0x5a0] sm:$0xff]
    %v960 = vld [vmem:[#allocation5 + $0x5a8] sm:$0xff]
    %v961 = vld [vmem:[#allocation5 + $0x5b0] sm:$0xff]
    %v962 = vld [vmem:[#allocation5 + $0x5b8] sm:$0xff]
    %v963 = vld [vmem:[#allocation5 + $0x5c0] sm:$0xff]
    %v964 = vld [vmem:[#allocation5 + $0x5c8] sm:$0xff]
    %v965 = vld [vmem:[#allocation5 + $0x5d0] sm:$0xff]
    %v966 = vld [vmem:[#allocation5 + $0x5d8] sm:$0xff]
    %v967 = vld [vmem:[#allocation5 + $0x5e0] sm:$0xff]
    %v968 = vld [vmem:[#allocation5 + $0x5e8] sm:$0xff]
    %v969 = vld [vmem:[#allocation5 + $0x5f0] sm:$0xff]
    %v970 = vld [vmem:[#allocation5 + $0x5f8] sm:$0xff]
    %v971 = vld [vmem:[#allocation5 + $0x600] sm:$0xff]
    %v972 = vld [vmem:[#allocation5 + $0x608] sm:$0xff]
    %v973 = vld [vmem:[#allocation5 + $0x610] sm:$0xff]
    %v974 = vld [vmem:[#allocation5 + $0x618] sm:$0xff]
    %v975 = vld [vmem:[#allocation5 + $0x620] sm:$0xff]
    %v976 = vld [vmem:[#allocation5 + $0x628] sm:$0xff]
    %v977 = vld [vmem:[#allocation5 + $0x630] sm:$0xff]
    %v978 = vld [vmem:[#allocation5 + $0x638] sm:$0xff]
    %v979 = vld [vmem:[#allocation5 + $0x640] sm:$0xff]
    %v980 = vld [vmem:[#allocation5 + $0x648] sm:$0xff]
    %v981 = vld [vmem:[#allocation5 + $0x650] sm:$0xff]
    %v982 = vld [vmem:[#allocation5 + $0x658] sm:$0xff]
    %v983 = vld [vmem:[#allocation5 + $0x660] sm:$0xff]
    %v984 = vld [vmem:[#allocation5 + $0x668] sm:$0xff]
    %v985 = vld [vmem:[#allocation5 + $0x670] sm:$0xff]
    %v986 = vld [vmem:[#allocation5 + $0x678] sm:$0xff]
    %v987 = vld [vmem:[#allocation5 + $0x680] sm:$0xff]
    %v988 = vld [vmem:[#allocation5 + $0x688] sm:$0xff]
    %v989 = vld [vmem:[#allocation5 + $0x690] sm:$0xff]
    %v990 = vld [vmem:[#allocation5 + $0x698] sm:$0xff]
    %v991 = vld [vmem:[#allocation5 + $0x6a0] sm:$0xff]
    %v992 = vld [vmem:[#allocation5 + $0x6a8] sm:$0xff]
    %v993 = vld [vmem:[#allocation5 + $0x6b0] sm:$0xff]
    %v994 = vld [vmem:[#allocation5 + $0x6b8] sm:$0xff]
    %v995 = vld [vmem:[#allocation5 + $0x6c0] sm:$0xff]
    %v996 = vld [vmem:[#allocation5 + $0x6c8] sm:$0xff]
    %v997 = vld [vmem:[#allocation5 + $0x6d0] sm:$0xff]
    %v998 = vld [vmem:[#allocation5 + $0x6d8] sm:$0xff]
    %v999 = vld [vmem:[#allocation5 + $0x6e0] sm:$0xff]
    %v1000 = vld [vmem:[#allocation5 + $0x6e8] sm:$0xff]
    %v1001 = vld [vmem:[#allocation5 + $0x6f0] sm:$0xff]
    %v1002 = vld [vmem:[#allocation5 + $0x6f8] sm:$0xff]
    %v1003 = vld [vmem:[#allocation5 + $0x700] sm:$0xff]
    %v1004 = vld [vmem:[#allocation5 + $0x708] sm:$0xff]
    %v1005 = vld [vmem:[#allocation5 + $0x710] sm:$0xff]
    %v1006 = vld [vmem:[#allocation5 + $0x718] sm:$0xff]
    %v1007 = vld [vmem:[#allocation5 + $0x720] sm:$0xff]
    %v1008 = vld [vmem:[#allocation5 + $0x728] sm:$0xff]
    %v1009 = vld [vmem:[#allocation5 + $0x730] sm:$0xff]
    %v1010 = vld [vmem:[#allocation5 + $0x738] sm:$0xff]
    %v1011 = vld [vmem:[#allocation5 + $0x740] sm:$0xff]
    %v1012 = vld [vmem:[#allocation5 + $0x748] sm:$0xff]
    %v1013 = vld [vmem:[#allocation5 + $0x750] sm:$0xff]
    %v1014 = vld [vmem:[#allocation5 + $0x758] sm:$0xff]
    %v1015 = vld [vmem:[#allocation5 + $0x760] sm:$0xff]
    %v1016 = vld [vmem:[#allocation5 + $0x768] sm:$0xff]
    %v1017 = vld [vmem:[#allocation5 + $0x770] sm:$0xff]
    %v1018 = vld [vmem:[#allocation5 + $0x778] sm:$0xff]
    %v1019 = vld [vmem:[#allocation5 + $0x780] sm:$0xff]
    %v1020 = vld [vmem:[#allocation5 + $0x788] sm:$0xff]
    %v1021 = vld [vmem:[#allocation5 + $0x790] sm:$0xff]
    %v1022 = vld [vmem:[#allocation5 + $0x798] sm:$0xff]
    %v1023 = vld [vmem:[#allocation5 + $0x7a0] sm:$0xff]
    %v1024 = vld [vmem:[#allocation5 + $0x7a8] sm:$0xff]
    %v1025 = vld [vmem:[#allocation5 + $0x7b0] sm:$0xff]
    %v1026 = vld [vmem:[#allocation5 + $0x7b8] sm:$0xff]
    %v1027 = vld [vmem:[#allocation5 + $0x7c0] sm:$0xff]
    %v1028 = vld [vmem:[#allocation5 + $0x7c8] sm:$0xff]
    %v1029 = vld [vmem:[#allocation5 + $0x7d0] sm:$0xff]
    %v1030 = vld [vmem:[#allocation5 + $0x7d8] sm:$0xff]
    %v1031 = vld [vmem:[#allocation5 + $0x7e0] sm:$0xff]
    %v1032 = vld [vmem:[#allocation5 + $0x7e8] sm:$0xff]
    %v1033 = vld [vmem:[#allocation5 + $0x7f0] sm:$0xff]
    %v1034 = vld [vmem:[#allocation5 + $0x7f8] sm:$0xff]
    %v1035 = vld [vmem:[%s4] sm:$0xf]
    %v1037 = vlaneseq
    %v1038 = vshrl.u32 %v1037, 7
    %v1039 = vsub.s32 0, %v1038
    %v1040 = vrot.slane %v1035, %v1039
    %v1041 = vlaneseq
    %v1042 = vshrl.u32 %v1041, 7
    %v1043 = vsub.s32 1, %v1042
    %v1044 = vrot.slane %v1035, %v1043
    %v1045 = vlaneseq
    %v1046 = vshrl.u32 %v1045, 7
    %v1047 = vsub.s32 2, %v1046
    %v1048 = vrot.slane %v1035, %v1047
    %v1049 = vlaneseq
    %v1050 = vshrl.u32 %v1049, 7
    %v1051 = vsub.s32 3, %v1050
    %v1052 = vrot.slane %v1035, %v1051
    %v1313 = vunpack.c.l.b16 %v779
    %v1314 = vunpack.c.h.b16 %v779
    %v1315 = vunpack.c.l.b16 %v780
    %v1316 = vunpack.c.h.b16 %v780
    %v1317 = vunpack.c.l.b16 %v781
    %v1318 = vunpack.c.h.b16 %v781
    %v1319 = vunpack.c.l.b16 %v782
    %v1320 = vunpack.c.h.b16 %v782
    %v1321 = vunpack.c.l.b16 %v783
    %v1322 = vunpack.c.h.b16 %v783
    %v1323 = vunpack.c.l.b16 %v784
    %v1324 = vunpack.c.h.b16 %v784
    %v1325 = vunpack.c.l.b16 %v785
    %v1326 = vunpack.c.h.b16 %v785
    %v1327 = vunpack.c.l.b16 %v786
    %v1328 = vunpack.c.h.b16 %v786
    %v1329 = vunpack.c.l.b16 %v787
    %v1330 = vunpack.c.h.b16 %v787
    %v1331 = vunpack.c.l.b16 %v788
    %v1332 = vunpack.c.h.b16 %v788
    %v1333 = vunpack.c.l.b16 %v789
    %v1334 = vunpack.c.h.b16 %v789
    %v1335 = vunpack.c.l.b16 %v790
    %v1336 = vunpack.c.h.b16 %v790
    %v1337 = vunpack.c.l.b16 %v791
    %v1338 = vunpack.c.h.b16 %v791
    %v1339 = vunpack.c.l.b16 %v792
    %v1340 = vunpack.c.h.b16 %v792
    %v1341 = vunpack.c.l.b16 %v793
    %v1342 = vunpack.c.h.b16 %v793
    %v1343 = vunpack.c.l.b16 %v794
    %v1344 = vunpack.c.h.b16 %v794
    %v1345 = vunpack.c.l.b16 %v795
    %v1346 = vunpack.c.h.b16 %v795
    %v1347 = vunpack.c.l.b16 %v796
    %v1348 = vunpack.c.h.b16 %v796
    %v1349 = vunpack.c.l.b16 %v797
    %v1350 = vunpack.c.h.b16 %v797
    %v1351 = vunpack.c.l.b16 %v798
    %v1352 = vunpack.c.h.b16 %v798
    %v1353 = vunpack.c.l.b16 %v799
    %v1354 = vunpack.c.h.b16 %v799
    %v1355 = vunpack.c.l.b16 %v800
    %v1356 = vunpack.c.h.b16 %v800
    %v1357 = vunpack.c.l.b16 %v801
    %v1358 = vunpack.c.h.b16 %v801
    %v1359 = vunpack.c.l.b16 %v802
    %v1360 = vunpack.c.h.b16 %v802
    %v1361 = vunpack.c.l.b16 %v803
    %v1362 = vunpack.c.h.b16 %v803
    %v1363 = vunpack.c.l.b16 %v804
    %v1364 = vunpack.c.h.b16 %v804
    %v1365 = vunpack.c.l.b16 %v805
    %v1366 = vunpack.c.h.b16 %v805
    %v1367 = vunpack.c.l.b16 %v806
    %v1368 = vunpack.c.h.b16 %v806
    %v1369 = vunpack.c.l.b16 %v807
    %v1370 = vunpack.c.h.b16 %v807
    %v1371 = vunpack.c.l.b16 %v808
    %v1372 = vunpack.c.h.b16 %v808
    %v1373 = vunpack.c.l.b16 %v809
    %v1374 = vunpack.c.h.b16 %v809
    %v1375 = vunpack.c.l.b16 %v810
    %v1376 = vunpack.c.h.b16 %v810
    %v1377 = vunpack.c.l.b16 %v811
    %v1378 = vunpack.c.h.b16 %v811
    %v1379 = vunpack.c.l.b16 %v812
    %v1380 = vunpack.c.h.b16 %v812
    %v1381 = vunpack.c.l.b16 %v813
    %v1382 = vunpack.c.h.b16 %v813
    %v1383 = vunpack.c.l.b16 %v814
    %v1384 = vunpack.c.h.b16 %v814
    %v1385 = vunpack.c.l.b16 %v815
    %v1386 = vunpack.c.h.b16 %v815
    %v1387 = vunpack.c.l.b16 %v816
    %v1388 = vunpack.c.h.b16 %v816
    %v1389 = vunpack.c.l.b16 %v817
    %v1390 = vunpack.c.h.b16 %v817
    %v1391 = vunpack.c.l.b16 %v818
    %v1392 = vunpack.c.h.b16 %v818
    %v1393 = vunpack.c.l.b16 %v819
    %v1394 = vunpack.c.h.b16 %v819
    %v1395 = vunpack.c.l.b16 %v820
    %v1396 = vunpack.c.h.b16 %v820
    %v1397 = vunpack.c.l.b16 %v821
    %v1398 = vunpack.c.h.b16 %v821
    %v1399 = vunpack.c.l.b16 %v822
    %v1400 = vunpack.c.h.b16 %v822
    %v1401 = vunpack.c.l.b16 %v823
    %v1402 = vunpack.c.h.b16 %v823
    %v1403 = vunpack.c.l.b16 %v824
    %v1404 = vunpack.c.h.b16 %v824
    %v1405 = vunpack.c.l.b16 %v825
    %v1406 = vunpack.c.h.b16 %v825
    %v1407 = vunpack.c.l.b16 %v826
    %v1408 = vunpack.c.h.b16 %v826
    %v1409 = vunpack.c.l.b16 %v827
    %v1410 = vunpack.c.h.b16 %v827
    %v1411 = vunpack.c.l.b16 %v828
    %v1412 = vunpack.c.h.b16 %v828
    %v1413 = vunpack.c.l.b16 %v829
    %v1414 = vunpack.c.h.b16 %v829
    %v1415 = vunpack.c.l.b16 %v830
    %v1416 = vunpack.c.h.b16 %v830
    %v1417 = vunpack.c.l.b16 %v831
    %v1418 = vunpack.c.h.b16 %v831
    %v1419 = vunpack.c.l.b16 %v832
    %v1420 = vunpack.c.h.b16 %v832
    %v1421 = vunpack.c.l.b16 %v833
    %v1422 = vunpack.c.h.b16 %v833
    %v1423 = vunpack.c.l.b16 %v834
    %v1424 = vunpack.c.h.b16 %v834
    %v1425 = vunpack.c.l.b16 %v835
    %v1426 = vunpack.c.h.b16 %v835
    %v1427 = vunpack.c.l.b16 %v836
    %v1428 = vunpack.c.h.b16 %v836
    %v1429 = vunpack.c.l.b16 %v837
    %v1430 = vunpack.c.h.b16 %v837
    %v1431 = vunpack.c.l.b16 %v838
    %v1432 = vunpack.c.h.b16 %v838
    %v1433 = vunpack.c.l.b16 %v839
    %v1434 = vunpack.c.h.b16 %v839
    %v1435 = vunpack.c.l.b16 %v840
    %v1436 = vunpack.c.h.b16 %v840
    %v1437 = vunpack.c.l.b16 %v841
    %v1438 = vunpack.c.h.b16 %v841
    %v1439 = vunpack.c.l.b16 %v842
    %v1440 = vunpack.c.h.b16 %v842
    %v1441 = vunpack.c.l.b16 %v843
    %v1442 = vunpack.c.h.b16 %v843
    %v1443 = vunpack.c.l.b16 %v844
    %v1444 = vunpack.c.h.b16 %v844
    %v1445 = vunpack.c.l.b16 %v845
    %v1446 = vunpack.c.h.b16 %v845
    %v1447 = vunpack.c.l.b16 %v846
    %v1448 = vunpack.c.h.b16 %v846
    %v1449 = vunpack.c.l.b16 %v847
    %v1450 = vunpack.c.h.b16 %v847
    %v1451 = vunpack.c.l.b16 %v848
    %v1452 = vunpack.c.h.b16 %v848
    %v1453 = vunpack.c.l.b16 %v849
    %v1454 = vunpack.c.h.b16 %v849
    %v1455 = vunpack.c.l.b16 %v850
    %v1456 = vunpack.c.h.b16 %v850
    %v1457 = vunpack.c.l.b16 %v851
    %v1458 = vunpack.c.h.b16 %v851
    %v1459 = vunpack.c.l.b16 %v852
    %v1460 = vunpack.c.h.b16 %v852
    %v1461 = vunpack.c.l.b16 %v853
    %v1462 = vunpack.c.h.b16 %v853
    %v1463 = vunpack.c.l.b16 %v854
    %v1464 = vunpack.c.h.b16 %v854
    %v1465 = vunpack.c.l.b16 %v855
    %v1466 = vunpack.c.h.b16 %v855
    %v1467 = vunpack.c.l.b16 %v856
    %v1468 = vunpack.c.h.b16 %v856
    %v1469 = vunpack.c.l.b16 %v857
    %v1470 = vunpack.c.h.b16 %v857
    %v1471 = vunpack.c.l.b16 %v858
    %v1472 = vunpack.c.h.b16 %v858
    %v1473 = vunpack.c.l.b16 %v859
    %v1474 = vunpack.c.h.b16 %v859
    %v1475 = vunpack.c.l.b16 %v860
    %v1476 = vunpack.c.h.b16 %v860
    %v1477 = vunpack.c.l.b16 %v861
    %v1478 = vunpack.c.h.b16 %v861
    %v1479 = vunpack.c.l.b16 %v862
    %v1480 = vunpack.c.h.b16 %v862
    %v1481 = vunpack.c.l.b16 %v863
    %v1482 = vunpack.c.h.b16 %v863
    %v1483 = vunpack.c.l.b16 %v864
    %v1484 = vunpack.c.h.b16 %v864
    %v1485 = vunpack.c.l.b16 %v865
    %v1486 = vunpack.c.h.b16 %v865
    %v1487 = vunpack.c.l.b16 %v866
    %v1488 = vunpack.c.h.b16 %v866
    %v1489 = vunpack.c.l.b16 %v867
    %v1490 = vunpack.c.h.b16 %v867
    %v1491 = vunpack.c.l.b16 %v868
    %v1492 = vunpack.c.h.b16 %v868
    %v1493 = vunpack.c.l.b16 %v869
    %v1494 = vunpack.c.h.b16 %v869
    %v1495 = vunpack.c.l.b16 %v870
    %v1496 = vunpack.c.h.b16 %v870
    %v1497 = vunpack.c.l.b16 %v871
    %v1498 = vunpack.c.h.b16 %v871
    %v1499 = vunpack.c.l.b16 %v872
    %v1500 = vunpack.c.h.b16 %v872
    %v1501 = vunpack.c.l.b16 %v873
    %v1502 = vunpack.c.h.b16 %v873
    %v1503 = vunpack.c.l.b16 %v874
    %v1504 = vunpack.c.h.b16 %v874
    %v1505 = vunpack.c.l.b16 %v875
    %v1506 = vunpack.c.h.b16 %v875
    %v1507 = vunpack.c.l.b16 %v876
    %v1508 = vunpack.c.h.b16 %v876
    %v1509 = vunpack.c.l.b16 %v877
    %v1510 = vunpack.c.h.b16 %v877
    %v1511 = vunpack.c.l.b16 %v878
    %v1512 = vunpack.c.h.b16 %v878
    %v1513 = vunpack.c.l.b16 %v879
    %v1514 = vunpack.c.h.b16 %v879
    %v1515 = vunpack.c.l.b16 %v880
    %v1516 = vunpack.c.h.b16 %v880
    %v1517 = vunpack.c.l.b16 %v881
    %v1518 = vunpack.c.h.b16 %v881
    %v1519 = vunpack.c.l.b16 %v882
    %v1520 = vunpack.c.h.b16 %v882
    %v1521 = vunpack.c.l.b16 %v883
    %v1522 = vunpack.c.h.b16 %v883
    %v1523 = vunpack.c.l.b16 %v884
    %v1524 = vunpack.c.h.b16 %v884
    %v1525 = vunpack.c.l.b16 %v885
    %v1526 = vunpack.c.h.b16 %v885
    %v1527 = vunpack.c.l.b16 %v886
    %v1528 = vunpack.c.h.b16 %v886
    %v1529 = vunpack.c.l.b16 %v887
    %v1530 = vunpack.c.h.b16 %v887
    %v1531 = vunpack.c.l.b16 %v888
    %v1532 = vunpack.c.h.b16 %v888
    %v1533 = vunpack.c.l.b16 %v889
    %v1534 = vunpack.c.h.b16 %v889
    %v1535 = vunpack.c.l.b16 %v890
    %v1536 = vunpack.c.h.b16 %v890
    %v1537 = vunpack.c.l.b16 %v891
    %v1538 = vunpack.c.h.b16 %v891
    %v1539 = vunpack.c.l.b16 %v892
    %v1540 = vunpack.c.h.b16 %v892
    %v1541 = vunpack.c.l.b16 %v893
    %v1542 = vunpack.c.h.b16 %v893
    %v1543 = vunpack.c.l.b16 %v894
    %v1544 = vunpack.c.h.b16 %v894
    %v1545 = vunpack.c.l.b16 %v895
    %v1546 = vunpack.c.h.b16 %v895
    %v1547 = vunpack.c.l.b16 %v896
    %v1548 = vunpack.c.h.b16 %v896
    %v1549 = vunpack.c.l.b16 %v897
    %v1550 = vunpack.c.h.b16 %v897
    %v1551 = vunpack.c.l.b16 %v898
    %v1552 = vunpack.c.h.b16 %v898
    %v1553 = vunpack.c.l.b16 %v899
    %v1554 = vunpack.c.h.b16 %v899
    %v1555 = vunpack.c.l.b16 %v900
    %v1556 = vunpack.c.h.b16 %v900
    %v1557 = vunpack.c.l.b16 %v901
    %v1558 = vunpack.c.h.b16 %v901
    %v1559 = vunpack.c.l.b16 %v902
    %v1560 = vunpack.c.h.b16 %v902
    %v1561 = vunpack.c.l.b16 %v903
    %v1562 = vunpack.c.h.b16 %v903
    %v1563 = vunpack.c.l.b16 %v904
    %v1564 = vunpack.c.h.b16 %v904
    %v1565 = vunpack.c.l.b16 %v905
    %v1566 = vunpack.c.h.b16 %v905
    %v1567 = vunpack.c.l.b16 %v906
    %v1568 = vunpack.c.h.b16 %v906
    %v1569 = vunpack.c.l.b16 %v907
    %v1570 = vunpack.c.h.b16 %v907
    %v1571 = vunpack.c.l.b16 %v908
    %v1572 = vunpack.c.h.b16 %v908
    %v1573 = vunpack.c.l.b16 %v909
    %v1574 = vunpack.c.h.b16 %v909
    %v1575 = vunpack.c.l.b16 %v910
    %v1576 = vunpack.c.h.b16 %v910
    %v1577 = vunpack.c.l.b16 %v911
    %v1578 = vunpack.c.h.b16 %v911
    %v1579 = vunpack.c.l.b16 %v912
    %v1580 = vunpack.c.h.b16 %v912
    %v1581 = vunpack.c.l.b16 %v913
    %v1582 = vunpack.c.h.b16 %v913
    %v1583 = vunpack.c.l.b16 %v914
    %v1584 = vunpack.c.h.b16 %v914
    %v1585 = vunpack.c.l.b16 %v915
    %v1586 = vunpack.c.h.b16 %v915
    %v1587 = vunpack.c.l.b16 %v916
    %v1588 = vunpack.c.h.b16 %v916
    %v1589 = vunpack.c.l.b16 %v917
    %v1590 = vunpack.c.h.b16 %v917
    %v1591 = vunpack.c.l.b16 %v918
    %v1592 = vunpack.c.h.b16 %v918
    %v1593 = vunpack.c.l.b16 %v919
    %v1594 = vunpack.c.h.b16 %v919
    %v1595 = vunpack.c.l.b16 %v920
    %v1596 = vunpack.c.h.b16 %v920
    %v1597 = vunpack.c.l.b16 %v921
    %v1598 = vunpack.c.h.b16 %v921
    %v1599 = vunpack.c.l.b16 %v922
    %v1600 = vunpack.c.h.b16 %v922
    %v1601 = vunpack.c.l.b16 %v923
    %v1602 = vunpack.c.h.b16 %v923
    %v1603 = vunpack.c.l.b16 %v924
    %v1604 = vunpack.c.h.b16 %v924
    %v1605 = vunpack.c.l.b16 %v925
    %v1606 = vunpack.c.h.b16 %v925
    %v1607 = vunpack.c.l.b16 %v926
    %v1608 = vunpack.c.h.b16 %v926
    %v1609 = vunpack.c.l.b16 %v927
    %v1610 = vunpack.c.h.b16 %v927
    %v1611 = vunpack.c.l.b16 %v928
    %v1612 = vunpack.c.h.b16 %v928
    %v1613 = vunpack.c.l.b16 %v929
    %v1614 = vunpack.c.h.b16 %v929
    %v1615 = vunpack.c.l.b16 %v930
    %v1616 = vunpack.c.h.b16 %v930
    %v1617 = vunpack.c.l.b16 %v931
    %v1618 = vunpack.c.h.b16 %v931
    %v1619 = vunpack.c.l.b16 %v932
    %v1620 = vunpack.c.h.b16 %v932
    %v1621 = vunpack.c.l.b16 %v933
    %v1622 = vunpack.c.h.b16 %v933
    %v1623 = vunpack.c.l.b16 %v934
    %v1624 = vunpack.c.h.b16 %v934
    %v1625 = vunpack.c.l.b16 %v935
    %v1626 = vunpack.c.h.b16 %v935
    %v1627 = vunpack.c.l.b16 %v936
    %v1628 = vunpack.c.h.b16 %v936
    %v1629 = vunpack.c.l.b16 %v937
    %v1630 = vunpack.c.h.b16 %v937
    %v1631 = vunpack.c.l.b16 %v938
    %v1632 = vunpack.c.h.b16 %v938
    %v1633 = vunpack.c.l.b16 %v939
    %v1634 = vunpack.c.h.b16 %v939
    %v1635 = vunpack.c.l.b16 %v940
    %v1636 = vunpack.c.h.b16 %v940
    %v1637 = vunpack.c.l.b16 %v941
    %v1638 = vunpack.c.h.b16 %v941
    %v1639 = vunpack.c.l.b16 %v942
    %v1640 = vunpack.c.h.b16 %v942
    %v1641 = vunpack.c.l.b16 %v943
    %v1642 = vunpack.c.h.b16 %v943
    %v1643 = vunpack.c.l.b16 %v944
    %v1644 = vunpack.c.h.b16 %v944
    %v1645 = vunpack.c.l.b16 %v945
    %v1646 = vunpack.c.h.b16 %v945
    %v1647 = vunpack.c.l.b16 %v946
    %v1648 = vunpack.c.h.b16 %v946
    %v1649 = vunpack.c.l.b16 %v947
    %v1650 = vunpack.c.h.b16 %v947
    %v1651 = vunpack.c.l.b16 %v948
    %v1652 = vunpack.c.h.b16 %v948
    %v1653 = vunpack.c.l.b16 %v949
    %v1654 = vunpack.c.h.b16 %v949
    %v1655 = vunpack.c.l.b16 %v950
    %v1656 = vunpack.c.h.b16 %v950
    %v1657 = vunpack.c.l.b16 %v951
    %v1658 = vunpack.c.h.b16 %v951
    %v1659 = vunpack.c.l.b16 %v952
    %v1660 = vunpack.c.h.b16 %v952
    %v1661 = vunpack.c.l.b16 %v953
    %v1662 = vunpack.c.h.b16 %v953
    %v1663 = vunpack.c.l.b16 %v954
    %v1664 = vunpack.c.h.b16 %v954
    %v1665 = vunpack.c.l.b16 %v955
    %v1666 = vunpack.c.h.b16 %v955
    %v1667 = vunpack.c.l.b16 %v956
    %v1668 = vunpack.c.h.b16 %v956
    %v1669 = vunpack.c.l.b16 %v957
    %v1670 = vunpack.c.h.b16 %v957
    %v1671 = vunpack.c.l.b16 %v958
    %v1672 = vunpack.c.h.b16 %v958
    %v1673 = vunpack.c.l.b16 %v959
    %v1674 = vunpack.c.h.b16 %v959
    %v1675 = vunpack.c.l.b16 %v960
    %v1676 = vunpack.c.h.b16 %v960
    %v1677 = vunpack.c.l.b16 %v961
    %v1678 = vunpack.c.h.b16 %v961
    %v1679 = vunpack.c.l.b16 %v962
    %v1680 = vunpack.c.h.b16 %v962
    %v1681 = vunpack.c.l.b16 %v963
    %v1682 = vunpack.c.h.b16 %v963
    %v1683 = vunpack.c.l.b16 %v964
    %v1684 = vunpack.c.h.b16 %v964
    %v1685 = vunpack.c.l.b16 %v965
    %v1686 = vunpack.c.h.b16 %v965
    %v1687 = vunpack.c.l.b16 %v966
    %v1688 = vunpack.c.h.b16 %v966
    %v1689 = vunpack.c.l.b16 %v967
    %v1690 = vunpack.c.h.b16 %v967
    %v1691 = vunpack.c.l.b16 %v968
    %v1692 = vunpack.c.h.b16 %v968
    %v1693 = vunpack.c.l.b16 %v969
    %v1694 = vunpack.c.h.b16 %v969
    %v1695 = vunpack.c.l.b16 %v970
    %v1696 = vunpack.c.h.b16 %v970
    %v1697 = vunpack.c.l.b16 %v971
    %v1698 = vunpack.c.h.b16 %v971
    %v1699 = vunpack.c.l.b16 %v972
    %v1700 = vunpack.c.h.b16 %v972
    %v1701 = vunpack.c.l.b16 %v973
    %v1702 = vunpack.c.h.b16 %v973
    %v1703 = vunpack.c.l.b16 %v974
    %v1704 = vunpack.c.h.b16 %v974
    %v1705 = vunpack.c.l.b16 %v975
    %v1706 = vunpack.c.h.b16 %v975
    %v1707 = vunpack.c.l.b16 %v976
    %v1708 = vunpack.c.h.b16 %v976
    %v1709 = vunpack.c.l.b16 %v977
    %v1710 = vunpack.c.h.b16 %v977
    %v1711 = vunpack.c.l.b16 %v978
    %v1712 = vunpack.c.h.b16 %v978
    %v1713 = vunpack.c.l.b16 %v979
    %v1714 = vunpack.c.h.b16 %v979
    %v1715 = vunpack.c.l.b16 %v980
    %v1716 = vunpack.c.h.b16 %v980
    %v1717 = vunpack.c.l.b16 %v981
    %v1718 = vunpack.c.h.b16 %v981
    %v1719 = vunpack.c.l.b16 %v982
    %v1720 = vunpack.c.h.b16 %v982
    %v1721 = vunpack.c.l.b16 %v983
    %v1722 = vunpack.c.h.b16 %v983
    %v1723 = vunpack.c.l.b16 %v984
    %v1724 = vunpack.c.h.b16 %v984
    %v1725 = vunpack.c.l.b16 %v985
    %v1726 = vunpack.c.h.b16 %v985
    %v1727 = vunpack.c.l.b16 %v986
    %v1728 = vunpack.c.h.b16 %v986
    %v1729 = vunpack.c.l.b16 %v987
    %v1730 = vunpack.c.h.b16 %v987
    %v1731 = vunpack.c.l.b16 %v988
    %v1732 = vunpack.c.h.b16 %v988
    %v1733 = vunpack.c.l.b16 %v989
    %v1734 = vunpack.c.h.b16 %v989
    %v1735 = vunpack.c.l.b16 %v990
    %v1736 = vunpack.c.h.b16 %v990
    %v1737 = vunpack.c.l.b16 %v991
    %v1738 = vunpack.c.h.b16 %v991
    %v1739 = vunpack.c.l.b16 %v992
    %v1740 = vunpack.c.h.b16 %v992
    %v1741 = vunpack.c.l.b16 %v993
    %v1742 = vunpack.c.h.b16 %v993
    %v1743 = vunpack.c.l.b16 %v994
    %v1744 = vunpack.c.h.b16 %v994
    %v1745 = vunpack.c.l.b16 %v995
    %v1746 = vunpack.c.h.b16 %v995
    %v1747 = vunpack.c.l.b16 %v996
    %v1748 = vunpack.c.h.b16 %v996
    %v1749 = vunpack.c.l.b16 %v997
    %v1750 = vunpack.c.h.b16 %v997
    %v1751 = vunpack.c.l.b16 %v998
    %v1752 = vunpack.c.h.b16 %v998
    %v1753 = vunpack.c.l.b16 %v999
    %v1754 = vunpack.c.h.b16 %v999
    %v1755 = vunpack.c.l.b16 %v1000
    %v1756 = vunpack.c.h.b16 %v1000
    %v1757 = vunpack.c.l.b16 %v1001
    %v1758 = vunpack.c.h.b16 %v1001
    %v1759 = vunpack.c.l.b16 %v1002
    %v1760 = vunpack.c.h.b16 %v1002
    %v1761 = vunpack.c.l.b16 %v1003
    %v1762 = vunpack.c.h.b16 %v1003
    %v1763 = vunpack.c.l.b16 %v1004
    %v1764 = vunpack.c.h.b16 %v1004
    %v1765 = vunpack.c.l.b16 %v1005
    %v1766 = vunpack.c.h.b16 %v1005
    %v1767 = vunpack.c.l.b16 %v1006
    %v1768 = vunpack.c.h.b16 %v1006
    %v1769 = vunpack.c.l.b16 %v1007
    %v1770 = vunpack.c.h.b16 %v1007
    %v1771 = vunpack.c.l.b16 %v1008
    %v1772 = vunpack.c.h.b16 %v1008
    %v1773 = vunpack.c.l.b16 %v1009
    %v1774 = vunpack.c.h.b16 %v1009
    %v1775 = vunpack.c.l.b16 %v1010
    %v1776 = vunpack.c.h.b16 %v1010
    %v1777 = vunpack.c.l.b16 %v1011
    %v1778 = vunpack.c.h.b16 %v1011
    %v1779 = vunpack.c.l.b16 %v1012
    %v1780 = vunpack.c.h.b16 %v1012
    %v1781 = vunpack.c.l.b16 %v1013
    %v1782 = vunpack.c.h.b16 %v1013
    %v1783 = vunpack.c.l.b16 %v1014
    %v1784 = vunpack.c.h.b16 %v1014
    %v1785 = vunpack.c.l.b16 %v1015
    %v1786 = vunpack.c.h.b16 %v1015
    %v1787 = vunpack.c.l.b16 %v1016
    %v1788 = vunpack.c.h.b16 %v1016
    %v1789 = vunpack.c.l.b16 %v1017
    %v1790 = vunpack.c.h.b16 %v1017
    %v1791 = vunpack.c.l.b16 %v1018
    %v1792 = vunpack.c.h.b16 %v1018
    %v1793 = vunpack.c.l.b16 %v1019
    %v1794 = vunpack.c.h.b16 %v1019
    %v1795 = vunpack.c.l.b16 %v1020
    %v1796 = vunpack.c.h.b16 %v1020
    %v1797 = vunpack.c.l.b16 %v1021
    %v1798 = vunpack.c.h.b16 %v1021
    %v1799 = vunpack.c.l.b16 %v1022
    %v1800 = vunpack.c.h.b16 %v1022
    %v1801 = vunpack.c.l.b16 %v1023
    %v1802 = vunpack.c.h.b16 %v1023
    %v1803 = vunpack.c.l.b16 %v1024
    %v1804 = vunpack.c.h.b16 %v1024
    %v1805 = vunpack.c.l.b16 %v1025
    %v1806 = vunpack.c.h.b16 %v1025
    %v1807 = vunpack.c.l.b16 %v1026
    %v1808 = vunpack.c.h.b16 %v1026
    %v1809 = vunpack.c.l.b16 %v1027
    %v1810 = vunpack.c.h.b16 %v1027
    %v1811 = vunpack.c.l.b16 %v1028
    %v1812 = vunpack.c.h.b16 %v1028
    %v1813 = vunpack.c.l.b16 %v1029
    %v1814 = vunpack.c.h.b16 %v1029
    %v1815 = vunpack.c.l.b16 %v1030
    %v1816 = vunpack.c.h.b16 %v1030
    %v1817 = vunpack.c.l.b16 %v1031
    %v1818 = vunpack.c.h.b16 %v1031
    %v1819 = vunpack.c.l.b16 %v1032
    %v1820 = vunpack.c.h.b16 %v1032
    %v1821 = vunpack.c.l.b16 %v1033
    %v1822 = vunpack.c.h.b16 %v1033
    %v1823 = vunpack.c.l.b16 %v1034
    %v1824 = vunpack.c.h.b16 %v1034
    %v1825 = vpack.c.b16 %v1317, %v1313
    %v1826 = vpack.c.b16 %v1318, %v1314
    %v1827 = vpack.c.b16 %v1319, %v1315
    %v1828 = vpack.c.b16 %v1320, %v1316
    %v1829 = vpack.c.b16 %v1325, %v1321
    %v1830 = vpack.c.b16 %v1326, %v1322
    %v1831 = vpack.c.b16 %v1327, %v1323
    %v1832 = vpack.c.b16 %v1328, %v1324
    %v1833 = vpack.c.b16 %v1333, %v1329
    %v1834 = vpack.c.b16 %v1334, %v1330
    %v1835 = vpack.c.b16 %v1335, %v1331
    %v1836 = vpack.c.b16 %v1336, %v1332
    %v1837 = vpack.c.b16 %v1341, %v1337
    %v1838 = vpack.c.b16 %v1342, %v1338
    %v1839 = vpack.c.b16 %v1343, %v1339
    %v1840 = vpack.c.b16 %v1344, %v1340
    %v1841 = vpack.c.b16 %v1349, %v1345
    %v1842 = vpack.c.b16 %v1350, %v1346
    %v1843 = vpack.c.b16 %v1351, %v1347
    %v1844 = vpack.c.b16 %v1352, %v1348
    %v1845 = vpack.c.b16 %v1357, %v1353
    %v1846 = vpack.c.b16 %v1358, %v1354
    %v1847 = vpack.c.b16 %v1359, %v1355
    %v1848 = vpack.c.b16 %v1360, %v1356
    %v1849 = vpack.c.b16 %v1365, %v1361
    %v1850 = vpack.c.b16 %v1366, %v1362
    %v1851 = vpack.c.b16 %v1367, %v1363
    %v1852 = vpack.c.b16 %v1368, %v1364
    %v1853 = vpack.c.b16 %v1373, %v1369
    %v1854 = vpack.c.b16 %v1374, %v1370
    %v1855 = vpack.c.b16 %v1375, %v1371
    %v1856 = vpack.c.b16 %v1376, %v1372
    %v1857 = vpack.c.b16 %v1381, %v1377
    %v1858 = vpack.c.b16 %v1382, %v1378
    %v1859 = vpack.c.b16 %v1383, %v1379
    %v1860 = vpack.c.b16 %v1384, %v1380
    %v1861 = vpack.c.b16 %v1389, %v1385
    %v1862 = vpack.c.b16 %v1390, %v1386
    %v1863 = vpack.c.b16 %v1391, %v1387
    %v1864 = vpack.c.b16 %v1392, %v1388
    %v1865 = vpack.c.b16 %v1397, %v1393
    %v1866 = vpack.c.b16 %v1398, %v1394
    %v1867 = vpack.c.b16 %v1399, %v1395
    %v1868 = vpack.c.b16 %v1400, %v1396
    %v1869 = vpack.c.b16 %v1405, %v1401
    %v1870 = vpack.c.b16 %v1406, %v1402
    %v1871 = vpack.c.b16 %v1407, %v1403
    %v1872 = vpack.c.b16 %v1408, %v1404
    %v1873 = vpack.c.b16 %v1413, %v1409
    %v1874 = vpack.c.b16 %v1414, %v1410
    %v1875 = vpack.c.b16 %v1415, %v1411
    %v1876 = vpack.c.b16 %v1416, %v1412
    %v1877 = vpack.c.b16 %v1421, %v1417
    %v1878 = vpack.c.b16 %v1422, %v1418
    %v1879 = vpack.c.b16 %v1423, %v1419
    %v1880 = vpack.c.b16 %v1424, %v1420
    %v1881 = vpack.c.b16 %v1429, %v1425
    %v1882 = vpack.c.b16 %v1430, %v1426
    %v1883 = vpack.c.b16 %v1431, %v1427
    %v1884 = vpack.c.b16 %v1432, %v1428
    %v1885 = vpack.c.b16 %v1437, %v1433
    %v1886 = vpack.c.b16 %v1438, %v1434
    %v1887 = vpack.c.b16 %v1439, %v1435
    %v1888 = vpack.c.b16 %v1440, %v1436
    %v1889 = vpack.c.b16 %v1445, %v1441
    %v1890 = vpack.c.b16 %v1446, %v1442
    %v1891 = vpack.c.b16 %v1447, %v1443
    %v1892 = vpack.c.b16 %v1448, %v1444
    %v1893 = vpack.c.b16 %v1453, %v1449
    %v1894 = vpack.c.b16 %v1454, %v1450
    %v1895 = vpack.c.b16 %v1455, %v1451
    %v1896 = vpack.c.b16 %v1456, %v1452
    %v1897 = vpack.c.b16 %v1461, %v1457
    %v1898 = vpack.c.b16 %v1462, %v1458
    %v1899 = vpack.c.b16 %v1463, %v1459
    %v1900 = vpack.c.b16 %v1464, %v1460
    %v1901 = vpack.c.b16 %v1469, %v1465
    %v1902 = vpack.c.b16 %v1470, %v1466
    %v1903 = vpack.c.b16 %v1471, %v1467
    %v1904 = vpack.c.b16 %v1472, %v1468
    %v1905 = vpack.c.b16 %v1477, %v1473
    %v1906 = vpack.c.b16 %v1478, %v1474
    %v1907 = vpack.c.b16 %v1479, %v1475
    %v1908 = vpack.c.b16 %v1480, %v1476
    %v1909 = vpack.c.b16 %v1485, %v1481
    %v1910 = vpack.c.b16 %v1486, %v1482
    %v1911 = vpack.c.b16 %v1487, %v1483
    %v1912 = vpack.c.b16 %v1488, %v1484
    %v1913 = vpack.c.b16 %v1493, %v1489
    %v1914 = vpack.c.b16 %v1494, %v1490
    %v1915 = vpack.c.b16 %v1495, %v1491
    %v1916 = vpack.c.b16 %v1496, %v1492
    %v1917 = vpack.c.b16 %v1501, %v1497
    %v1918 = vpack.c.b16 %v1502, %v1498
    %v1919 = vpack.c.b16 %v1503, %v1499
    %v1920 = vpack.c.b16 %v1504, %v1500
    %v1921 = vpack.c.b16 %v1509, %v1505
    %v1922 = vpack.c.b16 %v1510, %v1506
    %v1923 = vpack.c.b16 %v1511, %v1507
    %v1924 = vpack.c.b16 %v1512, %v1508
    %v1925 = vpack.c.b16 %v1517, %v1513
    %v1926 = vpack.c.b16 %v1518, %v1514
    %v1927 = vpack.c.b16 %v1519, %v1515
    %v1928 = vpack.c.b16 %v1520, %v1516
    %v1929 = vpack.c.b16 %v1525, %v1521
    %v1930 = vpack.c.b16 %v1526, %v1522
    %v1931 = vpack.c.b16 %v1527, %v1523
    %v1932 = vpack.c.b16 %v1528, %v1524
    %v1933 = vpack.c.b16 %v1533, %v1529
    %v1934 = vpack.c.b16 %v1534, %v1530
    %v1935 = vpack.c.b16 %v1535, %v1531
    %v1936 = vpack.c.b16 %v1536, %v1532
    %v1937 = vpack.c.b16 %v1541, %v1537
    %v1938 = vpack.c.b16 %v1542, %v1538
    %v1939 = vpack.c.b16 %v1543, %v1539
    %v1940 = vpack.c.b16 %v1544, %v1540
    %v1941 = vpack.c.b16 %v1549, %v1545
    %v1942 = vpack.c.b16 %v1550, %v1546
    %v1943 = vpack.c.b16 %v1551, %v1547
    %v1944 = vpack.c.b16 %v1552, %v1548
    %v1945 = vpack.c.b16 %v1557, %v1553
    %v1946 = vpack.c.b16 %v1558, %v1554
    %v1947 = vpack.c.b16 %v1559, %v1555
    %v1948 = vpack.c.b16 %v1560, %v1556
    %v1949 = vpack.c.b16 %v1565, %v1561
    %v1950 = vpack.c.b16 %v1566, %v1562
    %v1951 = vpack.c.b16 %v1567, %v1563
    %v1952 = vpack.c.b16 %v1568, %v1564
    %v1953 = vpack.c.b16 %v1573, %v1569
    %v1954 = vpack.c.b16 %v1574, %v1570
    %v1955 = vpack.c.b16 %v1575, %v1571
    %v1956 = vpack.c.b16 %v1576, %v1572
    %v1957 = vpack.c.b16 %v1581, %v1577
    %v1958 = vpack.c.b16 %v1582, %v1578
    %v1959 = vpack.c.b16 %v1583, %v1579
    %v1960 = vpack.c.b16 %v1584, %v1580
    %v1961 = vpack.c.b16 %v1589, %v1585
    %v1962 = vpack.c.b16 %v1590, %v1586
    %v1963 = vpack.c.b16 %v1591, %v1587
    %v1964 = vpack.c.b16 %v1592, %v1588
    %v1965 = vpack.c.b16 %v1597, %v1593
    %v1966 = vpack.c.b16 %v1598, %v1594
    %v1967 = vpack.c.b16 %v1599, %v1595
    %v1968 = vpack.c.b16 %v1600, %v1596
    %v1969 = vpack.c.b16 %v1605, %v1601
    %v1970 = vpack.c.b16 %v1606, %v1602
    %v1971 = vpack.c.b16 %v1607, %v1603
    %v1972 = vpack.c.b16 %v1608, %v1604
    %v1973 = vpack.c.b16 %v1613, %v1609
    %v1974 = vpack.c.b16 %v1614, %v1610
    %v1975 = vpack.c.b16 %v1615, %v1611
    %v1976 = vpack.c.b16 %v1616, %v1612
    %v1977 = vpack.c.b16 %v1621, %v1617
    %v1978 = vpack.c.b16 %v1622, %v1618
    %v1979 = vpack.c.b16 %v1623, %v1619
    %v1980 = vpack.c.b16 %v1624, %v1620
    %v1981 = vpack.c.b16 %v1629, %v1625
    %v1982 = vpack.c.b16 %v1630, %v1626
    %v1983 = vpack.c.b16 %v1631, %v1627
    %v1984 = vpack.c.b16 %v1632, %v1628
    %v1985 = vpack.c.b16 %v1637, %v1633
    %v1986 = vpack.c.b16 %v1638, %v1634
    %v1987 = vpack.c.b16 %v1639, %v1635
    %v1988 = vpack.c.b16 %v1640, %v1636
    %v1989 = vpack.c.b16 %v1645, %v1641
    %v1990 = vpack.c.b16 %v1646, %v1642
    %v1991 = vpack.c.b16 %v1647, %v1643
    %v1992 = vpack.c.b16 %v1648, %v1644
    %v1993 = vpack.c.b16 %v1653, %v1649
    %v1994 = vpack.c.b16 %v1654, %v1650
    %v1995 = vpack.c.b16 %v1655, %v1651
    %v1996 = vpack.c.b16 %v1656, %v1652
    %v1997 = vpack.c.b16 %v1661, %v1657
    %v1998 = vpack.c.b16 %v1662, %v1658
    %v1999 = vpack.c.b16 %v1663, %v1659
    %v2000 = vpack.c.b16 %v1664, %v1660
    %v2001 = vpack.c.b16 %v1669, %v1665
    %v2002 = vpack.c.b16 %v1670, %v1666
    %v2003 = vpack.c.b16 %v1671, %v1667
    %v2004 = vpack.c.b16 %v1672, %v1668
    %v2005 = vpack.c.b16 %v1677, %v1673
    %v2006 = vpack.c.b16 %v1678, %v1674
    %v2007 = vpack.c.b16 %v1679, %v1675
    %v2008 = vpack.c.b16 %v1680, %v1676
    %v2009 = vpack.c.b16 %v1685, %v1681
    %v2010 = vpack.c.b16 %v1686, %v1682
    %v2011 = vpack.c.b16 %v1687, %v1683
    %v2012 = vpack.c.b16 %v1688, %v1684
    %v2013 = vpack.c.b16 %v1693, %v1689
    %v2014 = vpack.c.b16 %v1694, %v1690
    %v2015 = vpack.c.b16 %v1695, %v1691
    %v2016 = vpack.c.b16 %v1696, %v1692
    %v2017 = vpack.c.b16 %v1701, %v1697
    %v2018 = vpack.c.b16 %v1702, %v1698
    %v2019 = vpack.c.b16 %v1703, %v1699
    %v2020 = vpack.c.b16 %v1704, %v1700
    %v2021 = vpack.c.b16 %v1709, %v1705
    %v2022 = vpack.c.b16 %v1710, %v1706
    %v2023 = vpack.c.b16 %v1711, %v1707
    %v2024 = vpack.c.b16 %v1712, %v1708
    %v2025 = vpack.c.b16 %v1717, %v1713
    %v2026 = vpack.c.b16 %v1718, %v1714
    %v2027 = vpack.c.b16 %v1719, %v1715
    %v2028 = vpack.c.b16 %v1720, %v1716
    %v2029 = vpack.c.b16 %v1725, %v1721
    %v2030 = vpack.c.b16 %v1726, %v1722
    %v2031 = vpack.c.b16 %v1727, %v1723
    %v2032 = vpack.c.b16 %v1728, %v1724
    %v2033 = vpack.c.b16 %v1733, %v1729
    %v2034 = vpack.c.b16 %v1734, %v1730
    %v2035 = vpack.c.b16 %v1735, %v1731
    %v2036 = vpack.c.b16 %v1736, %v1732
    %v2037 = vpack.c.b16 %v1741, %v1737
    %v2038 = vpack.c.b16 %v1742, %v1738
    %v2039 = vpack.c.b16 %v1743, %v1739
    %v2040 = vpack.c.b16 %v1744, %v1740
    %v2041 = vpack.c.b16 %v1749, %v1745
    %v2042 = vpack.c.b16 %v1750, %v1746
    %v2043 = vpack.c.b16 %v1751, %v1747
    %v2044 = vpack.c.b16 %v1752, %v1748
    %v2045 = vpack.c.b16 %v1757, %v1753
    %v2046 = vpack.c.b16 %v1758, %v1754
    %v2047 = vpack.c.b16 %v1759, %v1755
    %v2048 = vpack.c.b16 %v1760, %v1756
    %v2049 = vpack.c.b16 %v1765, %v1761
    %v2050 = vpack.c.b16 %v1766, %v1762
    %v2051 = vpack.c.b16 %v1767, %v1763
    %v2052 = vpack.c.b16 %v1768, %v1764
    %v2053 = vpack.c.b16 %v1773, %v1769
    %v2054 = vpack.c.b16 %v1774, %v1770
    %v2055 = vpack.c.b16 %v1775, %v1771
    %v2056 = vpack.c.b16 %v1776, %v1772
    %v2057 = vpack.c.b16 %v1781, %v1777
    %v2058 = vpack.c.b16 %v1782, %v1778
    %v2059 = vpack.c.b16 %v1783, %v1779
    %v2060 = vpack.c.b16 %v1784, %v1780
    %v2061 = vpack.c.b16 %v1789, %v1785
    %v2062 = vpack.c.b16 %v1790, %v1786
    %v2063 = vpack.c.b16 %v1791, %v1787
    %v2064 = vpack.c.b16 %v1792, %v1788
    %v2065 = vpack.c.b16 %v1797, %v1793
    %v2066 = vpack.c.b16 %v1798, %v1794
    %v2067 = vpack.c.b16 %v1799, %v1795
    %v2068 = vpack.c.b16 %v1800, %v1796
    %v2069 = vpack.c.b16 %v1805, %v1801
    %v2070 = vpack.c.b16 %v1806, %v1802
    %v2071 = vpack.c.b16 %v1807, %v1803
    %v2072 = vpack.c.b16 %v1808, %v1804
    %v2073 = vpack.c.b16 %v1813, %v1809
    %v2074 = vpack.c.b16 %v1814, %v1810
    %v2075 = vpack.c.b16 %v1815, %v1811
    %v2076 = vpack.c.b16 %v1816, %v1812
    %v2077 = vpack.c.b16 %v1821, %v1817
    %v2078 = vpack.c.b16 %v1822, %v1818
    %v2079 = vpack.c.b16 %v1823, %v1819
    %v2080 = vpack.c.b16 %v1824, %v1820
    %2337 = vmatprep.subr.bf16.mxu0 %v1826
    %2338 = vmatpush1.bf16.msra.mxu0 %v1825
    %2339 = vmatprep.subr.bf16.mxu0 %v1830
    %2340 = vmatpush1.bf16.msra.mxu0 %v1829
    %2341 = vmatprep.subr.bf16.mxu0 %v1834
    %2342 = vmatpush1.bf16.msra.mxu0 %v1833
    %2343 = vmatprep.subr.bf16.mxu0 %v1838
    %2344 = vmatpush1.bf16.msra.mxu0 %v1837
    %2345 = vmatprep.subr.bf16.mxu0 %v1842
    %2346 = vmatpush1.bf16.msra.mxu0 %v1841
    %2347 = vmatprep.subr.bf16.mxu0 %v1846
    %2348 = vmatpush1.bf16.msra.mxu0 %v1845
    %2349 = vmatprep.subr.bf16.mxu0 %v1850
    %2350 = vmatpush1.bf16.msra.mxu0 %v1849
    %2351 = vmatprep.subr.bf16.mxu0 %v1854
    %2352 = vmatpush1.bf16.msra.mxu0 %v1853
    %2353 = vmatprep.subr.bf16.mxu0 %v1858
    %2354 = vmatpush1.bf16.msra.mxu0 %v1857
    %2355 = vmatprep.subr.bf16.mxu0 %v1862
    %2356 = vmatpush1.bf16.msra.mxu0 %v1861
    %2357 = vmatprep.subr.bf16.mxu0 %v1866
    %2358 = vmatpush1.bf16.msra.mxu0 %v1865
    %2359 = vmatprep.subr.bf16.mxu0 %v1870
    %2360 = vmatpush1.bf16.msra.mxu0 %v1869
    %2361 = vmatprep.subr.bf16.mxu0 %v1874
    %2362 = vmatpush1.bf16.msra.mxu0 %v1873
    %2363 = vmatprep.subr.bf16.mxu0 %v1878
    %2364 = vmatpush1.bf16.msra.mxu0 %v1877
    %2365 = vmatprep.subr.bf16.mxu0 %v1882
    %2366 = vmatpush1.bf16.msra.mxu0 %v1881
    %2367 = vmatprep.subr.bf16.mxu0 %v1886
    %2368 = vmatpush1.bf16.msra.mxu0 %v1885
    %2369 = vmatprep.mubr.bf16.mxu0 %v772
    %2370 = vmatmul.mubr.bf16.gmra.mrb[0].mxu0 %v771
    %v2371 = vpop.f32.mrb[0].mxu0
    %v2372 = vadd.f32 %v1040, %v2371
    %v2373 = vpop.f32.mrb[0].mxu0
    %v2374 = vadd.f32 %v1044, %v2373
    %v2375 = vpop.f32.mrb[0].mxu0
    %v2376 = vpop.f32.mrb[0].mxu0
    %2377 = vdwg.mxu0
    %2378 = vmatprep.subr.bf16.mxu0 %v1890
    %2379 = vmatpush1.bf16.msra.mxu0 %v1889
    %2380 = vmatprep.subr.bf16.mxu0 %v1894
    %2381 = vmatpush1.bf16.msra.mxu0 %v1893
    %2382 = vmatprep.subr.bf16.mxu0 %v1898
    %2383 = vmatpush1.bf16.msra.mxu0 %v1897
    %2384 = vmatprep.subr.bf16.mxu0 %v1902
    %2385 = vmatpush1.bf16.msra.mxu0 %v1901
    %2386 = vmatprep.subr.bf16.mxu0 %v1906
    %2387 = vmatpush1.bf16.msra.mxu0 %v1905
    %2388 = vmatprep.subr.bf16.mxu0 %v1910
    %2389 = vmatpush1.bf16.msra.mxu0 %v1909
    %2390 = vmatprep.subr.bf16.mxu0 %v1914
    %2391 = vmatpush1.bf16.msra.mxu0 %v1913
    %2392 = vmatprep.subr.bf16.mxu0 %v1918
    %2393 = vmatpush1.bf16.msra.mxu0 %v1917
    %2394 = vmatprep.subr.bf16.mxu0 %v1922
    %2395 = vmatpush1.bf16.msra.mxu0 %v1921
    %2396 = vmatprep.subr.bf16.mxu0 %v1926
    %2397 = vmatpush1.bf16.msra.mxu0 %v1925
    %2398 = vmatprep.subr.bf16.mxu0 %v1930
    %2399 = vmatpush1.bf16.msra.mxu0 %v1929
    %2400 = vmatprep.subr.bf16.mxu0 %v1934
    %2401 = vmatpush1.bf16.msra.mxu0 %v1933
    %2402 = vmatprep.subr.bf16.mxu0 %v1938
    %2403 = vmatpush1.bf16.msra.mxu0 %v1937
    %2404 = vmatprep.subr.bf16.mxu0 %v1942
    %2405 = vmatpush1.bf16.msra.mxu0 %v1941
    %2406 = vmatprep.subr.bf16.mxu0 %v1946
    %2407 = vmatpush1.bf16.msra.mxu0 %v1945
    %2408 = vmatprep.subr.bf16.mxu0 %v1950
    %2409 = vmatpush1.bf16.msra.mxu0 %v1949
    %2410 = vmatprep.mubr.bf16.mxu0 %v774
    %2411 = vmatmul.mubr.bf16.gmra.mrb[0].mxu0 %v773
    %v2412 = vpop.f32.mrb[0].mxu0
    %v2413 = vadd.f32 %v2372, %v2412
    %v2414 = vpop.f32.mrb[0].mxu0
    %v2415 = vadd.f32 %v2374, %v2414
    %v2416 = vpop.f32.mrb[0].mxu0
    %v2417 = vpop.f32.mrb[0].mxu0
    %2418 = vdwg.mxu0
    %2419 = vmatprep.subr.bf16.mxu0 %v1954
    %2420 = vmatpush1.bf16.msra.mxu0 %v1953
    %2421 = vmatprep.subr.bf16.mxu0 %v1958
    %2422 = vmatpush1.bf16.msra.mxu0 %v1957
    %2423 = vmatprep.subr.bf16.mxu0 %v1962
    %2424 = vmatpush1.bf16.msra.mxu0 %v1961
    %2425 = vmatprep.subr.bf16.mxu0 %v1966
    %2426 = vmatpush1.bf16.msra.mxu0 %v1965
    %2427 = vmatprep.subr.bf16.mxu0 %v1970
    %2428 = vmatpush1.bf16.msra.mxu0 %v1969
    %2429 = vmatprep.subr.bf16.mxu0 %v1974
    %2430 = vmatpush1.bf16.msra.mxu0 %v1973
    %2431 = vmatprep.subr.bf16.mxu0 %v1978
    %2432 = vmatpush1.bf16.msra.mxu0 %v1977
    %2433 = vmatprep.subr.bf16.mxu0 %v1982
    %2434 = vmatpush1.bf16.msra.mxu0 %v1981
    %2435 = vmatprep.subr.bf16.mxu0 %v1986
    %2436 = vmatpush1.bf16.msra.mxu0 %v1985
    %2437 = vmatprep.subr.bf16.mxu0 %v1990
    %2438 = vmatpush1.bf16.msra.mxu0 %v1989
    %2439 = vmatprep.subr.bf16.mxu0 %v1994
    %2440 = vmatpush1.bf16.msra.mxu0 %v1993
    %2441 = vmatprep.subr.bf16.mxu0 %v1998
    %2442 = vmatpush1.bf16.msra.mxu0 %v1997
    %2443 = vmatprep.subr.bf16.mxu0 %v2002
    %2444 = vmatpush1.bf16.msra.mxu0 %v2001
    %2445 = vmatprep.subr.bf16.mxu0 %v2006
    %2446 = vmatpush1.bf16.msra.mxu0 %v2005
    %2447 = vmatprep.subr.bf16.mxu0 %v2010
    %2448 = vmatpush1.bf16.msra.mxu0 %v2009
    %2449 = vmatprep.subr.bf16.mxu0 %v2014
    %2450 = vmatpush1.bf16.msra.mxu0 %v2013
    %2451 = vmatprep.mubr.bf16.mxu0 %v776
    %2452 = vmatmul.mubr.bf16.gmra.mrb[0].mxu0 %v775
    %v2453 = vpop.f32.mrb[0].mxu0
    %v2454 = vadd.f32 %v2413, %v2453
    %v2455 = vpop.f32.mrb[0].mxu0
    %v2456 = vadd.f32 %v2415, %v2455
    %v2457 = vpop.f32.mrb[0].mxu0
    %v2458 = vpop.f32.mrb[0].mxu0
    %2459 = vdwg.mxu0
    %2460 = vmatprep.subr.bf16.mxu0 %v2018
    %2461 = vmatpush1.bf16.msra.mxu0 %v2017
    %2462 = vmatprep.subr.bf16.mxu0 %v2022
    %2463 = vmatpush1.bf16.msra.mxu0 %v2021
    %2464 = vmatprep.subr.bf16.mxu0 %v2026
    %2465 = vmatpush1.bf16.msra.mxu0 %v2025
    %2466 = vmatprep.subr.bf16.mxu0 %v2030
    %2467 = vmatpush1.bf16.msra.mxu0 %v2029
    %2468 = vmatprep.subr.bf16.mxu0 %v2034
    %2469 = vmatpush1.bf16.msra.mxu0 %v2033
    %2470 = vmatprep.subr.bf16.mxu0 %v2038
    %2471 = vmatpush1.bf16.msra.mxu0 %v2037
    %2472 = vmatprep.subr.bf16.mxu0 %v2042
    %2473 = vmatpush1.bf16.msra.mxu0 %v2041
    %2474 = vmatprep.subr.bf16.mxu0 %v2046
    %2475 = vmatpush1.bf16.msra.mxu0 %v2045
    %2476 = vmatprep.subr.bf16.mxu0 %v2050
    %2477 = vmatpush1.bf16.msra.mxu0 %v2049
    %2478 = vmatprep.subr.bf16.mxu0 %v2054
    %2479 = vmatpush1.bf16.msra.mxu0 %v2053
    %2480 = vmatprep.subr.bf16.mxu0 %v2058
    %2481 = vmatpush1.bf16.msra.mxu0 %v2057
    %2482 = vmatprep.subr.bf16.mxu0 %v2062
    %2483 = vmatpush1.bf16.msra.mxu0 %v2061
    %2484 = vmatprep.subr.bf16.mxu0 %v2066
    %2485 = vmatpush1.bf16.msra.mxu0 %v2065
    %2486 = vmatprep.subr.bf16.mxu0 %v2070
    %2487 = vmatpush1.bf16.msra.mxu0 %v2069
    %2488 = vmatprep.subr.bf16.mxu0 %v2074
    %2489 = vmatpush1.bf16.msra.mxu0 %v2073
    %2490 = vmatprep.subr.bf16.mxu0 %v2078
    %2491 = vmatpush1.bf16.msra.mxu0 %v2077
    %2492 = vmatprep.mubr.bf16.mxu0 %v778
    %2493 = vmatmul.mubr.bf16.gmra.mrb[0].mxu0 %v777
    %v2494 = vpop.f32.mrb[0].mxu0
    %v2495 = vadd.f32 %v2454, %v2494
    %v2496 = vpop.f32.mrb[0].mxu0
    %v2497 = vadd.f32 %v2456, %v2496
    %v2498 = vpop.f32.mrb[0].mxu0
    %v2499 = vpop.f32.mrb[0].mxu0
    %2500 = vdwg.mxu0
    %2501 = vmatprep.subr.bf16.mxu0 %v1828
    %2502 = vmatpush1.bf16.msra.mxu0 %v1827
    %2503 = vmatprep.subr.bf16.mxu0 %v1832
    %2504 = vmatpush1.bf16.msra.mxu0 %v1831
    %2505 = vmatprep.subr.bf16.mxu0 %v1836
    %2506 = vmatpush1.bf16.msra.mxu0 %v1835
    %2507 = vmatprep.subr.bf16.mxu0 %v1840
    %2508 = vmatpush1.bf16.msra.mxu0 %v1839
    %2509 = vmatprep.subr.bf16.mxu0 %v1844
    %2510 = vmatpush1.bf16.msra.mxu0 %v1843
    %2511 = vmatprep.subr.bf16.mxu0 %v1848
    %2512 = vmatpush1.bf16.msra.mxu0 %v1847
    %2513 = vmatprep.subr.bf16.mxu0 %v1852
    %2514 = vmatpush1.bf16.msra.mxu0 %v1851
    %2515 = vmatprep.subr.bf16.mxu0 %v1856
    %2516 = vmatpush1.bf16.msra.mxu0 %v1855
    %2517 = vmatprep.subr.bf16.mxu0 %v1860
    %2518 = vmatpush1.bf16.msra.mxu0 %v1859
    %2519 = vmatprep.subr.bf16.mxu0 %v1864
    %2520 = vmatpush1.bf16.msra.mxu0 %v1863
    %2521 = vmatprep.subr.bf16.mxu0 %v1868
    %2522 = vmatpush1.bf16.msra.mxu0 %v1867
    %2523 = vmatprep.subr.bf16.mxu0 %v1872
    %2524 = vmatpush1.bf16.msra.mxu0 %v1871
    %2525 = vmatprep.subr.bf16.mxu0 %v1876
    %2526 = vmatpush1.bf16.msra.mxu0 %v1875
    %2527 = vmatprep.subr.bf16.mxu0 %v1880
    %2528 = vmatpush1.bf16.msra.mxu0 %v1879
    %2529 = vmatprep.subr.bf16.mxu0 %v1884
    %2530 = vmatpush1.bf16.msra.mxu0 %v1883
    %2531 = vmatprep.subr.bf16.mxu0 %v1888
    %2532 = vmatpush1.bf16.msra.mxu0 %v1887
    %2533 = vmatprep.mubr.bf16.mxu0 %v772
    %2534 = vmatmul.mubr.bf16.gmra.mrb[0].mxu0 %v771
    %v2535 = vpop.f32.mrb[0].mxu0
    %v2536 = vadd.f32 %v1048, %v2535
    %v2537 = vpop.f32.mrb[0].mxu0
    %v2538 = vadd.f32 %v1052, %v2537
    %v2539 = vpop.f32.mrb[0].mxu0
    %v2540 = vpop.f32.mrb[0].mxu0
    %2541 = vdwg.mxu0
    %2542 = vmatprep.subr.bf16.mxu0 %v1892
    %2543 = vmatpush1.bf16.msra.mxu0 %v1891
    %2544 = vmatprep.subr.bf16.mxu0 %v1896
    %2545 = vmatpush1.bf16.msra.mxu0 %v1895
    %2546 = vmatprep.subr.bf16.mxu0 %v1900
    %2547 = vmatpush1.bf16.msra.mxu0 %v1899
    %2548 = vmatprep.subr.bf16.mxu0 %v1904
    %2549 = vmatpush1.bf16.msra.mxu0 %v1903
    %2550 = vmatprep.subr.bf16.mxu0 %v1908
    %2551 = vmatpush1.bf16.msra.mxu0 %v1907
    %2552 = vmatprep.subr.bf16.mxu0 %v1912
    %2553 = vmatpush1.bf16.msra.mxu0 %v1911
    %2554 = vmatprep.subr.bf16.mxu0 %v1916
    %2555 = vmatpush1.bf16.msra.mxu0 %v1915
    %2556 = vmatprep.subr.bf16.mxu0 %v1920
    %2557 = vmatpush1.bf16.msra.mxu0 %v1919
    %2558 = vmatprep.subr.bf16.mxu0 %v1924
    %2559 = vmatpush1.bf16.msra.mxu0 %v1923
    %2560 = vmatprep.subr.bf16.mxu0 %v1928
    %2561 = vmatpush1.bf16.msra.mxu0 %v1927
    %2562 = vmatprep.subr.bf16.mxu0 %v1932
    %2563 = vmatpush1.bf16.msra.mxu0 %v1931
    %2564 = vmatprep.subr.bf16.mxu0 %v1936
    %2565 = vmatpush1.bf16.msra.mxu0 %v1935
    %2566 = vmatprep.subr.bf16.mxu0 %v1940
    %2567 = vmatpush1.bf16.msra.mxu0 %v1939
    %2568 = vmatprep.subr.bf16.mxu0 %v1944
    %2569 = vmatpush1.bf16.msra.mxu0 %v1943
    %2570 = vmatprep.subr.bf16.mxu0 %v1948
    %2571 = vmatpush1.bf16.msra.mxu0 %v1947
    %2572 = vmatprep.subr.bf16.mxu0 %v1952
    %2573 = vmatpush1.bf16.msra.mxu0 %v1951
    %2574 = vmatprep.mubr.bf16.mxu0 %v774
    %2575 = vmatmul.mubr.bf16.gmra.mrb[0].mxu0 %v773
    %v2576 = vpop.f32.mrb[0].mxu0
    %v2577 = vadd.f32 %v2536, %v2576
    %v2578 = vpop.f32.mrb[0].mxu0
    %v2579 = vadd.f32 %v2538, %v2578
    %v2580 = vpop.f32.mrb[0].mxu0
    %v2581 = vpop.f32.mrb[0].mxu0
    %2582 = vdwg.mxu0
    %2583 = vmatprep.subr.bf16.mxu0 %v1956
    %2584 = vmatpush1.bf16.msra.mxu0 %v1955
    %2585 = vmatprep.subr.bf16.mxu0 %v1960
    %2586 = vmatpush1.bf16.msra.mxu0 %v1959
    %2587 = vmatprep.subr.bf16.mxu0 %v1964
    %2588 = vmatpush1.bf16.msra.mxu0 %v1963
    %2589 = vmatprep.subr.bf16.mxu0 %v1968
    %2590 = vmatpush1.bf16.msra.mxu0 %v1967
    %2591 = vmatprep.subr.bf16.mxu0 %v1972
    %2592 = vmatpush1.bf16.msra.mxu0 %v1971
    %2593 = vmatprep.subr.bf16.mxu0 %v1976
    %2594 = vmatpush1.bf16.msra.mxu0 %v1975
    %2595 = vmatprep.subr.bf16.mxu0 %v1980
    %2596 = vmatpush1.bf16.msra.mxu0 %v1979
    %2597 = vmatprep.subr.bf16.mxu0 %v1984
    %2598 = vmatpush1.bf16.msra.mxu0 %v1983
    %2599 = vmatprep.subr.bf16.mxu0 %v1988
    %2600 = vmatpush1.bf16.msra.mxu0 %v1987
    %2601 = vmatprep.subr.bf16.mxu0 %v1992
    %2602 = vmatpush1.bf16.msra.mxu0 %v1991
    %2603 = vmatprep.subr.bf16.mxu0 %v1996
    %2604 = vmatpush1.bf16.msra.mxu0 %v1995
    %2605 = vmatprep.subr.bf16.mxu0 %v2000
    %2606 = vmatpush1.bf16.msra.mxu0 %v1999
    %2607 = vmatprep.subr.bf16.mxu0 %v2004
    %2608 = vmatpush1.bf16.msra.mxu0 %v2003
    %2609 = vmatprep.subr.bf16.mxu0 %v2008
    %2610 = vmatpush1.bf16.msra.mxu0 %v2007
    %2611 = vmatprep.subr.bf16.mxu0 %v2012
    %2612 = vmatpush1.bf16.msra.mxu0 %v2011
    %2613 = vmatprep.subr.bf16.mxu0 %v2016
    %2614 = vmatpush1.bf16.msra.mxu0 %v2015
    %2615 = vmatprep.mubr.bf16.mxu0 %v776
    %2616 = vmatmul.mubr.bf16.gmra.mrb[0].mxu0 %v775
    %v2617 = vpop.f32.mrb[0].mxu0
    %v2618 = vadd.f32 %v2577, %v2617
    %v2619 = vpop.f32.mrb[0].mxu0
    %v2620 = vadd.f32 %v2579, %v2619
    %v2621 = vpop.f32.mrb[0].mxu0
    %v2622 = vpop.f32.mrb[0].mxu0
    %2623 = vdwg.mxu0
    %2624 = vmatprep.subr.bf16.mxu0 %v2020
    %2625 = vmatpush1.bf16.msra.mxu0 %v2019
    %2626 = vmatprep.subr.bf16.mxu0 %v2024
    %2627 = vmatpush1.bf16.msra.mxu0 %v2023
    %2628 = vmatprep.subr.bf16.mxu0 %v2028
    %2629 = vmatpush1.bf16.msra.mxu0 %v2027
    %2630 = vmatprep.subr.bf16.mxu0 %v2032
    %2631 = vmatpush1.bf16.msra.mxu0 %v2031
    %2632 = vmatprep.subr.bf16.mxu0 %v2036
    %2633 = vmatpush1.bf16.msra.mxu0 %v2035
    %2634 = vmatprep.subr.bf16.mxu0 %v2040
    %2635 = vmatpush1.bf16.msra.mxu0 %v2039
    %2636 = vmatprep.subr.bf16.mxu0 %v2044
    %2637 = vmatpush1.bf16.msra.mxu0 %v2043
    %2638 = vmatprep.subr.bf16.mxu0 %v2048
    %2639 = vmatpush1.bf16.msra.mxu0 %v2047
    %2640 = vmatprep.subr.bf16.mxu0 %v2052
    %2641 = vmatpush1.bf16.msra.mxu0 %v2051
    %2642 = vmatprep.subr.bf16.mxu0 %v2056
    %2643 = vmatpush1.bf16.msra.mxu0 %v2055
    %2644 = vmatprep.subr.bf16.mxu0 %v2060
    %2645 = vmatpush1.bf16.msra.mxu0 %v2059
    %2646 = vmatprep.subr.bf16.mxu0 %v2064
    %2647 = vmatpush1.bf16.msra.mxu0 %v2063
    %2648 = vmatprep.subr.bf16.mxu0 %v2068
    %2649 = vmatpush1.bf16.msra.mxu0 %v2067
    %2650 = vmatprep.subr.bf16.mxu0 %v2072
    %2651 = vmatpush1.bf16.msra.mxu0 %v2071
    %2652 = vmatprep.subr.bf16.mxu0 %v2076
    %2653 = vmatpush1.bf16.msra.mxu0 %v2075
    %2654 = vmatprep.subr.bf16.mxu0 %v2080
    %2655 = vmatpush1.bf16.msra.mxu0 %v2079
    %2656 = vmatprep.mubr.bf16.mxu0 %v778
    %2657 = vmatmul.mubr.bf16.gmra.mrb[0].mxu0 %v777
    %v2658 = vpop.f32.mrb[0].mxu0
    %v2659 = vadd.f32 %v2618, %v2658
    %v2660 = vpop.f32.mrb[0].mxu0
    %v2661 = vadd.f32 %v2620, %v2660
    %v2662 = vpop.f32.mrb[0].mxu0
    %v2663 = vpop.f32.mrb[0].mxu0
    %2664 = vdwg.mxu0
    %v2665 = vmax.f32 %v2495, 0.0
    %v2666 = vmax.f32 %v2497, 0.0
    %v2667 = vmax.f32 %v2659, 0.0
    %v2668 = vmax.f32 %v2661, 0.0
    %v2669 = vld [vmem:[%s5] sm:$0xf]
    %v2671 = vlaneseq
    %v2672 = vshrl.u32 %v2671, 7
    %v2673 = vsub.s32 0, %v2672
    %v2674 = vrot.slane %v2669, %v2673
    %v2675 = vlaneseq
    %v2676 = vshrl.u32 %v2675, 7
    %v2677 = vsub.s32 1, %v2676
    %v2678 = vrot.slane %v2669, %v2677
    %v2679 = vlaneseq
    %v2680 = vshrl.u32 %v2679, 7
    %v2681 = vsub.s32 2, %v2680
    %v2682 = vrot.slane %v2669, %v2681
    %v2683 = vlaneseq
    %v2684 = vshrl.u32 %v2683, 7
    %v2685 = vsub.s32 3, %v2684
    %v2686 = vrot.slane %v2669, %v2685
    %v2691 = vmul.f32 %v2665, %v2674
    %v2692 = vmul.f32 %v2666, %v2678
    %v2693 = vmul.f32 %v2667, %v2682
    %v2694 = vmul.f32 %v2668, %v2686
    %v2695 = vadd.f32 %v2691, %v2692
    %v2696 = vadd.f32 %v2695, %v2693
    %v2697 = vadd.f32 %v2696, %v2694
    %2698 = vadd.xlane.f32.xlu0 %v2697
    %v2699 = vpop.xlane.xlu0 %2698
    %v2700 = vld [vmem:[#allocation2] sm:$0x1]
    %v2702 = vlaneseq
    %v2703 = vshrl.u32 %v2702, 7
    %v2704 = vsub.s32 0, %v2703
    %v2705 = vrot.slane %v2700, %v2704
    %v2707 = vadd.f32 %v2699, %v2705
    %v2708 = vxor.u32 %v2707, 2147483648
    %v2709 = vmul.f32 %v2708, 1.442695
    %v2710 = vpow.pop %v2709
    %v2711 = vadd.f32 %v2710, 1.0
    %v2712 = vrcp.pop %v2711
    %v2713 = vmul.f32 1.0, %v2712
    %2715 = vset.pattern.permute.xlu0 0
    %2716 = vperm.xlu0 %2715, %v2713
    %v2717 = vpop.permute.xlu0 %2716
    %2719 = vst [vmem:[%s8] sm:$0xff] %v2717
    // Predicated region
    $region38: #{adversarial_net_forward.1} parent=1 // pred_check
      _
    $region39: #{adversarial_net_forward.1} parent=1 // pred_check_branch
      %2721 = sbr.rel (0) target = $region41
    $region40: #{adversarial_net_forward.1} parent=1 // pred_region
      _
    $region41: #{adversarial_net_forward.1} parent=1 // pred_fallthru
      _
    // Predicated region
    $region42: #{adversarial_net_forward.1} parent=1 // pred_check
      _
    $region43: #{adversarial_net_forward.1} parent=1 // pred_check_branch
      %2723 = sbr.rel (0) target = $region45
    $region44: #{adversarial_net_forward.1} parent=1 // pred_region
      _
    $region45: #{adversarial_net_forward.1} parent=1 // pred_fallthru
      _
    // Predicated region
    $region46: #{adversarial_net_forward.1} parent=1 // pred_check
      _
    $region47: #{adversarial_net_forward.1} parent=1 // pred_check_branch
      %2725 = sbr.rel (0) target = $region49
    $region48: #{adversarial_net_forward.1} parent=1 // pred_region
      _
    $region49: #{adversarial_net_forward.1} parent=1 // pred_fallthru
      _
    // Predicated region
    $region50: #{adversarial_net_forward.1} parent=1 // pred_check
      _
    $region51: #{adversarial_net_forward.1} parent=1 // pred_check_branch
      %2727 = sbr.rel (0) target = $region53
    $region52: #{adversarial_net_forward.1} parent=1 // pred_region
      _
    $region53: #{adversarial_net_forward.1} parent=1 // pred_fallthru
      _
    %2728 = vsyncpa [#allocation4], 1
    %2729 = vsyncpa [#allocation6], 1

</llo_original>
